<compile_context>
chip_gen: v5e
topology: v5e:2x2
jax: 0.10.0
libtpu: 0.0.40
codegen_flags: <defaults>
</compile_context>

<pallas_src>
import math
import functools

import jax
import jax.numpy as jnp
from jax import lax
from jax.experimental import pallas as pl
from jax.experimental.pallas import tpu as pltpu

EPS = 1e-8
LN_EPS = 1e-5


def _log_sigmoid(x):
    # numerically stable log(sigmoid(x)) = min(x, 0) - log(1 + exp(-|x|))
    return jnp.minimum(x, 0.0) - jnp.log(1.0 + jnp.exp(-jnp.abs(x)))


def _mlstm_cell_kernel(q_ref, k_ref, v_ref,
                       wq_ref, wk_ref, wv_ref,
                       wg_ref, bg_ref, gamma_ref,
                       o_ref, *, num_heads):
    S = q_ref.shape[1]
    E = q_ref.shape[2]
    NH = num_heads
    DH = E // NH

    qi = q_ref[0]   # (S, E), kept in input dtype (bf16-capable MXU operands)
    ki = k_ref[0]
    vi = v_ref[0]

    # head-wise (block-diagonal) q/k/v projections -> (S, E), f32 accumulation
    q = jnp.dot(qi, wq_ref[...], preferred_element_type=jnp.float32)
    k = jnp.dot(ki, wk_ref[...], preferred_element_type=jnp.float32)
    v = jnp.dot(vi, wv_ref[...], preferred_element_type=jnp.float32)

    # fused i/f gate preacts: cat([q_in,k_in,v_in]) @ [Wi^T | Wf^T] + [bi | bf]
    gates = (jnp.dot(qi, wg_ref[0:E, :], preferred_element_type=jnp.float32)
             + jnp.dot(ki, wg_ref[E:2 * E, :], preferred_element_type=jnp.float32)
             + jnp.dot(vi, wg_ref[2 * E:3 * E, :], preferred_element_type=jnp.float32)
             + bg_ref[...])                           # (S, 2*NH) f32
    ig = gates[:, :NH]                                # (S, NH)
    fg = gates[:, NH:2 * NH]                          # (S, NH)

    # stabilized log-space gate math stays in f32 (hoisted out of head loop)
    log_fg = _log_sigmoid(fg)                         # (S, NH)

    row = lax.broadcasted_iota(jnp.int32, (S, S), 0)
    col = lax.broadcasted_iota(jnp.int32, (S, S), 1)
    ltr = row >= col
    tril_f = ltr.astype(jnp.float32)

    # inclusive cumsum over time of log forget gates for ALL heads at once
    cs_all = jnp.dot(tril_f, log_fg, preferred_element_type=jnp.float32)  # (S, NH)
    cs_T = cs_all.T                                   # (NH, S): one transpose total
    ig_T = ig.T                                       # (NH, S)

    inv_sqrt_dh = 1.0 / math.sqrt(DH)
    neg_inf = jnp.float32(-jnp.inf)

    for h in range(NH):     # NH is small & static -> unrolled
        qh = q[:, h * DH:(h + 1) * DH]                # (S, DH)
        kh = k[:, h * DH:(h + 1) * DH]
        vh = v[:, h * DH:(h + 1) * DH]

        # log_D[i, j] = cs[i] - cs[j] + ig[j] for j <= i else -inf
        log_D = jnp.where(
            ltr, cs_all[:, h:h + 1] - cs_T[h:h + 1, :] + ig_T[h:h + 1, :], neg_inf)
        max_log_D = jnp.max(log_D, axis=-1, keepdims=True)   # (S, 1), finite on diag

        qk = jnp.dot(qh, kh.T, preferred_element_type=jnp.float32) * inv_sqrt_dh
        C = qk * jnp.exp(log_D - max_log_D)           # D fused in, no extra (S,S) temp
        sum_C_abs = jnp.abs(jnp.sum(C, axis=-1, keepdims=True))
        # NOTE: exp(-max_log_D) can overflow to +inf for very negative input gates;
        # the reciprocal then yields 0, matching the reference behavior (C / inf).
        normaliser = jnp.maximum(sum_C_abs, jnp.exp(-max_log_D))
        C_norm = C * pl.reciprocal(normaliser + EPS, approx=True)
        h_tilde = jnp.dot(C_norm, vh, preferred_element_type=jnp.float32)  # (S, DH)

        # MultiHeadLayerNorm == group norm with one group per head
        mu = jnp.mean(h_tilde, axis=-1, keepdims=True)
        var = jnp.mean((h_tilde - mu) ** 2, axis=-1, keepdims=True)
        h_norm = (h_tilde - mu) * lax.rsqrt(var + LN_EPS)

        # store this head directly into its output slice (no concatenate)
        gamma_h = gamma_ref[:, h * DH:(h + 1) * DH]   # (1, DH)
        o_ref[0, :, h * DH:(h + 1) * DH] = (h_norm * gamma_h).astype(o_ref.dtype)


def init_params(key, embedding_dim, num_heads, qkv_proj_blocksize):
    E = embedding_dim
    NH = num_heads
    hd = qkv_proj_blocksize
    NQH = E // hd
    kq, kk, kv, ki = jax.random.split(key, 4)
    std = math.sqrt(2.0 / (5.0 * hd))                        # small_init_init_
    wq = jax.random.normal(kq, (NQH, hd, hd), jnp.float32) * std
    wk = jax.random.normal(kk, (NQH, hd, hd), jnp.float32) * std
    wv = jax.random.normal(kv, (NQH, hd, hd), jnp.float32) * std
    igate_w = jnp.zeros((NH, 3 * E), jnp.float32)            # zero init
    igate_b = jax.random.normal(ki, (NH,), jnp.float32) * 0.1
    fgate_w = jnp.zeros((NH, 3 * E), jnp.float32)            # zero init
    fgate_b = jnp.linspace(3.4, 6.0, NH, dtype=jnp.float32)  # bias_linspace_init_
    affine_weight = jnp.zeros((E,), jnp.float32)             # residual weight -> gamma = 1
    return dict(wq=wq, wk=wk, wv=wv,
                igate_w=igate_w, igate_b=igate_b,
                fgate_w=fgate_w, fgate_b=fgate_b,
                affine_weight=affine_weight)


def mlstm_cell_forward(q_input, k_input, v_input, params, *, num_heads):
    B, S, E = q_input.shape
    NH = num_heads
    dt = q_input.dtype

    # block-diagonal form of LinearHeadwiseExpand: out = x @ W_bd,
    # W_bd[h*hd + i, h*hd + o] = w[h, o, i]
    # TODO(synk): for very large E (v7x 64 MiB VMEM) keep weights as (NQH, hd, hd)
    # and loop/batch over blocks instead of materializing dense (E, E) weights.
    def blockdiag(w):
        return jax.scipy.linalg.block_diag(*[w[h].T for h in range(w.shape[0])])

    wq_bd = blockdiag(params['wq']).astype(dt)               # (E, E), input dtype
    wk_bd = blockdiag(params['wk']).astype(dt)
    wv_bd = blockdiag(params['wv']).astype(dt)

    # fused [i | f] gate weight (3E, 2*NH) and bias (1, 2*NH)
    wg = jnp.concatenate([params['igate_w'].T, params['fgate_w'].T], axis=1).astype(dt)
    bg = jnp.concatenate([params['igate_b'], params['fgate_b']])[None, :].astype(jnp.float32)
    gamma = (1.0 + params['affine_weight'])[None, :].astype(jnp.float32)

    kernel = functools.partial(_mlstm_cell_kernel, num_heads=NH)

    in_specs = [
        pl.BlockSpec((1, S, E), lambda b: (b, 0, 0)),        # q_input
        pl.BlockSpec((1, S, E), lambda b: (b, 0, 0)),        # k_input
        pl.BlockSpec((1, S, E), lambda b: (b, 0, 0)),        # v_input
        pl.BlockSpec((E, E), lambda b: (0, 0)),              # wq (block-diag)
        pl.BlockSpec((E, E), lambda b: (0, 0)),              # wk
        pl.BlockSpec((E, E), lambda b: (0, 0)),              # wv
        pl.BlockSpec((3 * E, 2 * NH), lambda b: (0, 0)),     # fused [i|f] gate weight^T
        pl.BlockSpec((1, 2 * NH), lambda b: (0, 0)),         # fused gate bias
        pl.BlockSpec((1, E), lambda b: (0, 0)),              # outnorm gamma
    ]
    out_spec = pl.BlockSpec((1, S, E), lambda b: (b, 0, 0))

    # rough VMEM footprint: double-buffered activations/output + weights + f32 temps
    isz = jnp.dtype(dt).itemsize
    est = (4 * 2 * S * E * isz
           + 2 * (3 * E * E + 3 * E * 2 * NH + 2 * NH + E) * isz
           + 3 * S * E * 4 + 5 * S * S * 4 + 6 * S * NH * 4)
    vmem_limit = int(min(max(2 * est, 32 * 1024 * 1024), 64 * 1024 * 1024))

    # TODO(synk): for long sequences, tile S (chunkwise/flash-style grid over
    # (B, NH, q-block)) instead of materializing the full (S, S) decay matrix per head.
    return pl.pallas_call(
        kernel,
        out_shape=jax.ShapeDtypeStruct((B, S, E), dt),
        grid=(B,),
        in_specs=in_specs,
        out_specs=out_spec,
        compiler_params=pltpu.CompilerParams(
            dimension_semantics=("parallel",),
            vmem_limit_bytes=vmem_limit),
    )(q_input, k_input, v_input, wq_bd, wk_bd, wv_bd, wg, bg, gamma)


def reference_forward(q_input, k_input, v_input, params, *, num_heads):
    """Pure-JAX replica of mLSTMCell.forward (parallel_stabilized_simple path)."""
    B, S, E = q_input.shape
    NH = num_heads
    DH = E // NH
    NQH, _, hd_in = params['wq'].shape

    def headwise(x, w):
        xr = x.reshape(B, S, NQH, hd_in)
        return jnp.einsum('bshi,hoi->bsho', xr, w).reshape(B, S, E)

    q = headwise(q_input, params['wq']).reshape(B, S, NH, DH).transpose(0, 2, 1, 3)
    k = headwise(k_input, params['wk']).reshape(B, S, NH, DH).transpose(0, 2, 1, 3)
    v = headwise(v_input, params['wv']).reshape(B, S, NH, DH).transpose(0, 2, 1, 3)

    gate_in = jnp.concatenate([q_input, k_input, v_input], axis=-1)
    ig = gate_in @ params['igate_w'].T + params['igate_b']       # (B, S, NH)
    fg = gate_in @ params['fgate_w'].T + params['fgate_b']
    ig = jnp.transpose(ig, (0, 2, 1))[..., None]                 # (B, NH, S, 1)
    fg = jnp.transpose(fg, (0, 2, 1))[..., None]

    log_fg = _log_sigmoid(fg)
    cs = jnp.cumsum(log_fg, axis=-2)                             # (B, NH, S, 1)
    ltr = jnp.tril(jnp.ones((S, S), dtype=bool))
    logm = cs - jnp.swapaxes(cs, -2, -1)
    logm = jnp.where(ltr, logm, -jnp.inf)
    log_D = logm + jnp.swapaxes(ig, -2, -1)
    max_log_D = jnp.max(log_D, axis=-1, keepdims=True)
    D = jnp.exp(log_D - max_log_D)
    qk = jnp.einsum('bnsd,bntd->bnst', q, k) / math.sqrt(DH)
    C = qk * D
    norm = jnp.maximum(jnp.abs(jnp.sum(C, axis=-1, keepdims=True)),
                       jnp.exp(-max_log_D))
    Cn = C / (norm + EPS)
    h = jnp.einsum('bnst,bntd->bnsd', Cn, v)                     # (B, NH, S, DH)
    mu = jnp.mean(h, axis=-1, keepdims=True)
    var = jnp.mean((h - mu) ** 2, axis=-1, keepdims=True)
    hn = (h - mu) / jnp.sqrt(var + LN_EPS)
    gamma = 1.0 + params['affine_weight']
    return hn.transpose(0, 2, 1, 3).reshape(B, S, E) * gamma


if __name__ == "__main__":
    B, S = 2, 8
    embedding_dim, num_heads, qkv_proj_blocksize = 32, 4, 8  # context_length = S

    key = jax.random.PRNGKey(0)
    kp, kq, kk, kv, kg1, kg2, kg3 = jax.random.split(key, 7)
    params = init_params(kp, embedding_dim, num_heads, qkv_proj_blocksize)

    # perturb the (zero-initialized) gate weights / affine weight so the fused
    # gate matmul and gamma paths are actually exercised by the check
    params['igate_w'] = 0.05 * jax.random.normal(kg1, params['igate_w'].shape, jnp.float32)
    params['fgate_w'] = 0.05 * jax.random.normal(kg2, params['fgate_w'].shape, jnp.float32)
    params['affine_weight'] = 0.1 * jax.random.normal(kg3, params['affine_weight'].shape,
                                                      jnp.float32)

    q_in = jax.random.normal(kq, (B, S, embedding_dim), jnp.float32)
    k_in = jax.random.normal(kk, (B, S, embedding_dim), jnp.float32)
    v_in = jax.random.normal(kv, (B, S, embedding_dim), jnp.float32)

    out = mlstm_cell_forward(q_in, k_in, v_in, params, num_heads=num_heads)
    out = jax.block_until_ready(out)
    assert out.shape == (B, S, embedding_dim)

    ref = reference_forward(q_in, k_in, v_in, params, num_heads=num_heads)
    if not jnp.allclose(out, ref, atol=2e-3, rtol=2e-3):
        raise AssertionError("Pallas kernel does not match pure-JAX reference")

    print("KERNEL_OK")
</pallas_src>

<mosaic_0001>
module attributes {stable_mosaic.version = 11 : i64} {
  func.func @_mlstm_cell_kernel(%arg0: i32, %arg1: memref<1x8x32xf32, #tpu.memory_space<vmem>>, %arg2: memref<1x8x32xf32, #tpu.memory_space<vmem>>, %arg3: memref<1x8x32xf32, #tpu.memory_space<vmem>>, %arg4: memref<32x32xf32, #tpu.memory_space<vmem>>, %arg5: memref<32x32xf32, #tpu.memory_space<vmem>>, %arg6: memref<32x32xf32, #tpu.memory_space<vmem>>, %arg7: memref<96x8xf32, #tpu.memory_space<vmem>>, %arg8: memref<1x8xf32, #tpu.memory_space<vmem>>, %arg9: memref<1x32xf32, #tpu.memory_space<vmem>>, %arg10: memref<1x8x32xf32, #tpu.memory_space<vmem>>) attributes {dimension_semantics = [#tpu.dimension_semantics<parallel>], iteration_bounds = array<i64: 2>, scalar_prefetch = 0 : i64, scratch_operands = 0 : i64, tpu.core_type = #tpu.core_type<tc>, window_params = [{transform_indices = @transform_0, window_bounds = array<i64: 1, 8, 32>}, {transform_indices = @transform_1, window_bounds = array<i64: 1, 8, 32>}, {transform_indices = @transform_2, window_bounds = array<i64: 1, 8, 32>}, {pipeline_mode = #tpu.pipeline_mode<synchronous>, transform_indices = @transform_3, window_bounds = array<i64: 32, 32>}, {pipeline_mode = #tpu.pipeline_mode<synchronous>, transform_indices = @transform_4, window_bounds = array<i64: 32, 32>}, {pipeline_mode = #tpu.pipeline_mode<synchronous>, transform_indices = @transform_5, window_bounds = array<i64: 32, 32>}, {pipeline_mode = #tpu.pipeline_mode<synchronous>, transform_indices = @transform_6, window_bounds = array<i64: 96, 8>}, {pipeline_mode = #tpu.pipeline_mode<synchronous>, transform_indices = @transform_7, window_bounds = array<i64: 1, 8>}, {pipeline_mode = #tpu.pipeline_mode<synchronous>, transform_indices = @transform_8, window_bounds = array<i64: 1, 32>}, {transform_indices = @transform_9, window_bounds = array<i64: 1, 8, 32>}]} {
    %c0 = arith.constant 0 : index
    %c0_0 = arith.constant 0 : index
    %c0_1 = arith.constant 0 : index
    %0 = vector.load %arg1[%c0, %c0_0, %c0_1] : memref<1x8x32xf32, #tpu.memory_space<vmem>>, vector<1x8x32xf32>
    %1 = vector.shape_cast %0 : vector<1x8x32xf32> to vector<8x32xf32>
    %c0_2 = arith.constant 0 : index
    %c0_3 = arith.constant 0 : index
    %c0_4 = arith.constant 0 : index
    %2 = vector.load %arg2[%c0_2, %c0_3, %c0_4] : memref<1x8x32xf32, #tpu.memory_space<vmem>>, vector<1x8x32xf32>
    %3 = vector.shape_cast %2 : vector<1x8x32xf32> to vector<8x32xf32>
    %c0_5 = arith.constant 0 : index
    %c0_6 = arith.constant 0 : index
    %c0_7 = arith.constant 0 : index
    %4 = vector.load %arg3[%c0_5, %c0_6, %c0_7] : memref<1x8x32xf32, #tpu.memory_space<vmem>>, vector<1x8x32xf32>
    %5 = vector.shape_cast %4 : vector<1x8x32xf32> to vector<8x32xf32>
    %c0_8 = arith.constant 0 : index
    %c0_9 = arith.constant 0 : index
    %6 = vector.load %arg4[%c0_8, %c0_9] : memref<32x32xf32, #tpu.memory_space<vmem>>, vector<32x32xf32>
    %cst = arith.constant dense<0.000000e+00> : vector<8x32xf32>
    %7 = tpu.matmul %1, %6, %cst {dimension_numbers = #tpu.dot_dimension_numbers<[1], [0], [0], [1], [0, 0, 1, 1], [], []>} : vector<8x32xf32>, vector<32x32xf32>, vector<8x32xf32> -> vector<8x32xf32>
    %c0_10 = arith.constant 0 : index
    %c0_11 = arith.constant 0 : index
    %8 = vector.load %arg5[%c0_10, %c0_11] : memref<32x32xf32, #tpu.memory_space<vmem>>, vector<32x32xf32>
    %cst_12 = arith.constant dense<0.000000e+00> : vector<8x32xf32>
    %9 = tpu.matmul %3, %8, %cst_12 {dimension_numbers = #tpu.dot_dimension_numbers<[1], [0], [0], [1], [0, 0, 1, 1], [], []>} : vector<8x32xf32>, vector<32x32xf32>, vector<8x32xf32> -> vector<8x32xf32>
    %c0_13 = arith.constant 0 : index
    %c0_14 = arith.constant 0 : index
    %10 = vector.load %arg6[%c0_13, %c0_14] : memref<32x32xf32, #tpu.memory_space<vmem>>, vector<32x32xf32>
    %cst_15 = arith.constant dense<0.000000e+00> : vector<8x32xf32>
    %11 = tpu.matmul %5, %10, %cst_15 {dimension_numbers = #tpu.dot_dimension_numbers<[1], [0], [0], [1], [0, 0, 1, 1], [], []>} : vector<8x32xf32>, vector<32x32xf32>, vector<8x32xf32> -> vector<8x32xf32>
    %c0_16 = arith.constant 0 : index
    %c0_17 = arith.constant 0 : index
    %12 = vector.load %arg7[%c0_16, %c0_17] : memref<96x8xf32, #tpu.memory_space<vmem>>, vector<32x8xf32>
    %cst_18 = arith.constant dense<0.000000e+00> : vector<8x8xf32>
    %13 = tpu.matmul %1, %12, %cst_18 {dimension_numbers = #tpu.dot_dimension_numbers<[1], [0], [0], [1], [0, 0, 1, 1], [], []>} : vector<8x32xf32>, vector<32x8xf32>, vector<8x8xf32> -> vector<8x8xf32>
    %c32 = arith.constant 32 : index
    %c0_19 = arith.constant 0 : index
    %14 = vector.load %arg7[%c32, %c0_19] : memref<96x8xf32, #tpu.memory_space<vmem>>, vector<32x8xf32>
    %cst_20 = arith.constant dense<0.000000e+00> : vector<8x8xf32>
    %15 = tpu.matmul %3, %14, %cst_20 {dimension_numbers = #tpu.dot_dimension_numbers<[1], [0], [0], [1], [0, 0, 1, 1], [], []>} : vector<8x32xf32>, vector<32x8xf32>, vector<8x8xf32> -> vector<8x8xf32>
    %16 = arith.addf %13, %15 : vector<8x8xf32>
    %c64 = arith.constant 64 : index
    %c0_21 = arith.constant 0 : index
    %17 = vector.load %arg7[%c64, %c0_21] : memref<96x8xf32, #tpu.memory_space<vmem>>, vector<32x8xf32>
    %cst_22 = arith.constant dense<0.000000e+00> : vector<8x8xf32>
    %18 = tpu.matmul %5, %17, %cst_22 {dimension_numbers = #tpu.dot_dimension_numbers<[1], [0], [0], [1], [0, 0, 1, 1], [], []>} : vector<8x32xf32>, vector<32x8xf32>, vector<8x8xf32> -> vector<8x8xf32>
    %19 = arith.addf %16, %18 : vector<8x8xf32>
    %c0_23 = arith.constant 0 : index
    %c0_24 = arith.constant 0 : index
    %20 = vector.load %arg8[%c0_23, %c0_24] : memref<1x8xf32, #tpu.memory_space<vmem>>, vector<1x8xf32>
    %21 = vector.broadcast %20 : vector<1x8xf32> to vector<8x8xf32>
    %22 = arith.addf %19, %21 : vector<8x8xf32>
    %23 = vector.extract_strided_slice %22 {offsets = [0, 0], sizes = [8, 4], strides = [1, 1]} : vector<8x8xf32> to vector<8x4xf32>
    %24 = vector.extract_strided_slice %22 {offsets = [0, 4], sizes = [8, 4], strides = [1, 1]} : vector<8x8xf32> to vector<8x4xf32>
    %cst_25 = arith.constant 0.000000e+00 : f32
    %25 = vector.broadcast %cst_25 : f32 to vector<8x4xf32>
    %26 = arith.minimumf %24, %25 : vector<8x4xf32>
    %27 = math.absf %24 : vector<8x4xf32>
    %cst_26 = arith.constant 0.000000e+00 : f32
    %28 = vector.broadcast %cst_26 : f32 to vector<8x4xf32>
    %29 = arith.subf %28, %27 : vector<8x4xf32>
    %30 = math.exp %29 : vector<8x4xf32>
    %cst_27 = arith.constant 1.000000e+00 : f32
    %31 = vector.broadcast %cst_27 : f32 to vector<8x4xf32>
    %32 = arith.addf %31, %30 : vector<8x4xf32>
    %33 = math.log %32 : vector<8x4xf32>
    %34 = arith.subf %26, %33 : vector<8x4xf32>
    %35 = tpu.iota {dimensions = array<i32: 0>} : vector<8x8xi32>
    %36 = tpu.iota {dimensions = array<i32: 1>} : vector<8x8xi32>
    %37 = arith.cmpi sge, %35, %36 : vector<8x8xi32>
    %38 = arith.extui %37 : vector<8x8xi1> to vector<8x8xi32>
    %39 = arith.sitofp %38 : vector<8x8xi32> to vector<8x8xf32>
    %cst_28 = arith.constant dense<0.000000e+00> : vector<8x4xf32>
    %40 = tpu.matmul %39, %34, %cst_28 {dimension_numbers = #tpu.dot_dimension_numbers<[1], [0], [0], [1], [0, 0, 1, 1], [], []>} : vector<8x8xf32>, vector<8x4xf32>, vector<8x4xf32> -> vector<8x4xf32>
    %41 = tpu.transpose %40, [1, 0] : vector<8x4xf32> -> vector<4x8xf32>
    %42 = tpu.transpose %23, [1, 0] : vector<8x4xf32> -> vector<4x8xf32>
    %43 = vector.extract_strided_slice %7 {offsets = [0, 0], sizes = [8, 8], strides = [1, 1]} : vector<8x32xf32> to vector<8x8xf32>
    %44 = vector.extract_strided_slice %9 {offsets = [0, 0], sizes = [8, 8], strides = [1, 1]} : vector<8x32xf32> to vector<8x8xf32>
    %45 = vector.extract_strided_slice %11 {offsets = [0, 0], sizes = [8, 8], strides = [1, 1]} : vector<8x32xf32> to vector<8x8xf32>
    %46 = vector.extract_strided_slice %40 {offsets = [0, 0], sizes = [8, 1], strides = [1, 1]} : vector<8x4xf32> to vector<8x1xf32>
    %47 = vector.extract_strided_slice %41 {offsets = [0, 0], sizes = [1, 8], strides = [1, 1]} : vector<4x8xf32> to vector<1x8xf32>
    %48 = vector.broadcast %46 : vector<8x1xf32> to vector<8x8xf32>
    %49 = vector.broadcast %47 : vector<1x8xf32> to vector<8x8xf32>
    %50 = arith.subf %48, %49 : vector<8x8xf32>
    %51 = vector.extract_strided_slice %42 {offsets = [0, 0], sizes = [1, 8], strides = [1, 1]} : vector<4x8xf32> to vector<1x8xf32>
    %52 = vector.broadcast %51 : vector<1x8xf32> to vector<8x8xf32>
    %53 = arith.addf %50, %52 : vector<8x8xf32>
    %cst_29 = arith.constant 0xFF800000 : f32
    %54 = vector.broadcast %cst_29 : f32 to vector<8x8xf32>
    %55 = arith.select %37, %53, %54 : vector<8x8xi1>, vector<8x8xf32>
    %cst_30 = arith.constant dense<0xFF800000> : vector<8xf32>
    %56 = vector.multi_reduction <maximumf>, %55, %cst_30 [1] : vector<8x8xf32> to vector<8xf32>
    %57 = vector.shape_cast %56 : vector<8xf32> to vector<8x1xf32>
    %58 = tpu.transpose %44, [1, 0] : vector<8x8xf32> -> vector<8x8xf32>
    %cst_31 = arith.constant dense<0.000000e+00> : vector<8x8xf32>
    %59 = tpu.matmul %43, %58, %cst_31 {dimension_numbers = #tpu.dot_dimension_numbers<[1], [0], [0], [1], [0, 0, 1, 1], [], []>} : vector<8x8xf32>, vector<8x8xf32>, vector<8x8xf32> -> vector<8x8xf32>
    %cst_32 = arith.constant 0.353553385 : f32
    %60 = vector.broadcast %cst_32 : f32 to vector<8x8xf32>
    %61 = arith.mulf %59, %60 : vector<8x8xf32>
    %62 = vector.broadcast %57 : vector<8x1xf32> to vector<8x8xf32>
    %63 = arith.subf %55, %62 : vector<8x8xf32>
    %64 = math.exp %63 : vector<8x8xf32>
    %65 = arith.mulf %61, %64 : vector<8x8xf32>
    %cst_33 = arith.constant dense<0.000000e+00> : vector<8xf32>
    %66 = vector.multi_reduction <add>, %65, %cst_33 [1] : vector<8x8xf32> to vector<8xf32>
    %67 = vector.shape_cast %66 : vector<8xf32> to vector<8x1xf32>
    %68 = math.absf %67 : vector<8x1xf32>
    %cst_34 = arith.constant 0.000000e+00 : f32
    %69 = vector.broadcast %cst_34 : f32 to vector<8x1xf32>
    %70 = arith.subf %69, %57 : vector<8x1xf32>
    %71 = math.exp %70 : vector<8x1xf32>
    %72 = arith.maximumf %68, %71 : vector<8x1xf32>
    %cst_35 = arith.constant 9.99999993E-9 : f32
    %73 = vector.broadcast %cst_35 : f32 to vector<8x1xf32>
    %74 = arith.addf %72, %73 : vector<8x1xf32>
    %75 = tpu.reciprocal %74 {approx = true} : vector<8x1xf32> -> vector<8x1xf32>
    %76 = vector.broadcast %75 : vector<8x1xf32> to vector<8x8xf32>
    %77 = arith.mulf %65, %76 : vector<8x8xf32>
    %cst_36 = arith.constant dense<0.000000e+00> : vector<8x8xf32>
    %78 = tpu.matmul %77, %45, %cst_36 {dimension_numbers = #tpu.dot_dimension_numbers<[1], [0], [0], [1], [0, 0, 1, 1], [], []>} : vector<8x8xf32>, vector<8x8xf32>, vector<8x8xf32> -> vector<8x8xf32>
    %cst_37 = arith.constant dense<0.000000e+00> : vector<8xf32>
    %79 = vector.multi_reduction <add>, %78, %cst_37 [1] : vector<8x8xf32> to vector<8xf32>
    %80 = vector.shape_cast %79 : vector<8xf32> to vector<8x1xf32>
    %cst_38 = arith.constant 8.000000e+00 : f32
    %81 = vector.broadcast %cst_38 : f32 to vector<8x1xf32>
    %82 = arith.divf %80, %81 : vector<8x1xf32>
    %83 = vector.broadcast %82 : vector<8x1xf32> to vector<8x8xf32>
    %84 = arith.subf %78, %83 : vector<8x8xf32>
    %85 = arith.mulf %84, %84 : vector<8x8xf32>
    %cst_39 = arith.constant dense<0.000000e+00> : vector<8xf32>
    %86 = vector.multi_reduction <add>, %85, %cst_39 [1] : vector<8x8xf32> to vector<8xf32>
    %87 = vector.shape_cast %86 : vector<8xf32> to vector<8x1xf32>
    %cst_40 = arith.constant 8.000000e+00 : f32
    %88 = vector.broadcast %cst_40 : f32 to vector<8x1xf32>
    %89 = arith.divf %87, %88 : vector<8x1xf32>
    %90 = vector.broadcast %82 : vector<8x1xf32> to vector<8x8xf32>
    %91 = arith.subf %78, %90 : vector<8x8xf32>
    %cst_41 = arith.constant 9.99999974E-6 : f32
    %92 = vector.broadcast %cst_41 : f32 to vector<8x1xf32>
    %93 = arith.addf %89, %92 : vector<8x1xf32>
    %94 = math.rsqrt %93 : vector<8x1xf32>
    %95 = vector.broadcast %94 : vector<8x1xf32> to vector<8x8xf32>
    %96 = arith.mulf %91, %95 : vector<8x8xf32>
    %c0_42 = arith.constant 0 : index
    %c0_43 = arith.constant 0 : index
    %97 = vector.load %arg9[%c0_42, %c0_43] : memref<1x32xf32, #tpu.memory_space<vmem>>, vector<1x8xf32>
    %98 = vector.broadcast %97 : vector<1x8xf32> to vector<8x8xf32>
    %99 = arith.mulf %96, %98 : vector<8x8xf32>
    %c0_44 = arith.constant 0 : index
    %c0_45 = arith.constant 0 : index
    %c0_46 = arith.constant 0 : index
    %100 = vector.load %arg10[%c0_44, %c0_45, %c0_46] : memref<1x8x32xf32, #tpu.memory_space<vmem>>, vector<1x8x8xf32>
    %101 = vector.shape_cast %100 : vector<1x8x8xf32> to vector<8x8xf32>
    %102 = vector.shape_cast %99 : vector<8x8xf32> to vector<1x8x8xf32>
    tpu.vector_store %arg10[%c0_44, %c0_45, %c0_46], %102 {strides = array<i32>} : memref<1x8x32xf32, #tpu.memory_space<vmem>>, vector<1x8x8xf32>,
    %103 = vector.extract_strided_slice %7 {offsets = [0, 8], sizes = [8, 8], strides = [1, 1]} : vector<8x32xf32> to vector<8x8xf32>
    %104 = vector.extract_strided_slice %9 {offsets = [0, 8], sizes = [8, 8], strides = [1, 1]} : vector<8x32xf32> to vector<8x8xf32>
    %105 = vector.extract_strided_slice %11 {offsets = [0, 8], sizes = [8, 8], strides = [1, 1]} : vector<8x32xf32> to vector<8x8xf32>
    %106 = vector.extract_strided_slice %40 {offsets = [0, 1], sizes = [8, 1], strides = [1, 1]} : vector<8x4xf32> to vector<8x1xf32>
    %107 = vector.extract_strided_slice %41 {offsets = [1, 0], sizes = [1, 8], strides = [1, 1]} : vector<4x8xf32> to vector<1x8xf32>
    %108 = vector.broadcast %106 : vector<8x1xf32> to vector<8x8xf32>
    %109 = vector.broadcast %107 : vector<1x8xf32> to vector<8x8xf32>
    %110 = arith.subf %108, %109 : vector<8x8xf32>
    %111 = vector.extract_strided_slice %42 {offsets = [1, 0], sizes = [1, 8], strides = [1, 1]} : vector<4x8xf32> to vector<1x8xf32>
    %112 = vector.broadcast %111 : vector<1x8xf32> to vector<8x8xf32>
    %113 = arith.addf %110, %112 : vector<8x8xf32>
    %cst_47 = arith.constant 0xFF800000 : f32
    %114 = vector.broadcast %cst_47 : f32 to vector<8x8xf32>
    %115 = arith.select %37, %113, %114 : vector<8x8xi1>, vector<8x8xf32>
    %cst_48 = arith.constant dense<0xFF800000> : vector<8xf32>
    %116 = vector.multi_reduction <maximumf>, %115, %cst_48 [1] : vector<8x8xf32> to vector<8xf32>
    %117 = vector.shape_cast %116 : vector<8xf32> to vector<8x1xf32>
    %118 = tpu.transpose %104, [1, 0] : vector<8x8xf32> -> vector<8x8xf32>
    %cst_49 = arith.constant dense<0.000000e+00> : vector<8x8xf32>
    %119 = tpu.matmul %103, %118, %cst_49 {dimension_numbers = #tpu.dot_dimension_numbers<[1], [0], [0], [1], [0, 0, 1, 1], [], []>} : vector<8x8xf32>, vector<8x8xf32>, vector<8x8xf32> -> vector<8x8xf32>
    %cst_50 = arith.constant 0.353553385 : f32
    %120 = vector.broadcast %cst_50 : f32 to vector<8x8xf32>
    %121 = arith.mulf %119, %120 : vector<8x8xf32>
    %122 = vector.broadcast %117 : vector<8x1xf32> to vector<8x8xf32>
    %123 = arith.subf %115, %122 : vector<8x8xf32>
    %124 = math.exp %123 : vector<8x8xf32>
    %125 = arith.mulf %121, %124 : vector<8x8xf32>
    %cst_51 = arith.constant dense<0.000000e+00> : vector<8xf32>
    %126 = vector.multi_reduction <add>, %125, %cst_51 [1] : vector<8x8xf32> to vector<8xf32>
    %127 = vector.shape_cast %126 : vector<8xf32> to vector<8x1xf32>
    %128 = math.absf %127 : vector<8x1xf32>
    %cst_52 = arith.constant 0.000000e+00 : f32
    %129 = vector.broadcast %cst_52 : f32 to vector<8x1xf32>
    %130 = arith.subf %129, %117 : vector<8x1xf32>
    %131 = math.exp %130 : vector<8x1xf32>
    %132 = arith.maximumf %128, %131 : vector<8x1xf32>
    %cst_53 = arith.constant 9.99999993E-9 : f32
    %133 = vector.broadcast %cst_53 : f32 to vector<8x1xf32>
    %134 = arith.addf %132, %133 : vector<8x1xf32>
    %135 = tpu.reciprocal %134 {approx = true} : vector<8x1xf32> -> vector<8x1xf32>
    %136 = vector.broadcast %135 : vector<8x1xf32> to vector<8x8xf32>
    %137 = arith.mulf %125, %136 : vector<8x8xf32>
    %cst_54 = arith.constant dense<0.000000e+00> : vector<8x8xf32>
    %138 = tpu.matmul %137, %105, %cst_54 {dimension_numbers = #tpu.dot_dimension_numbers<[1], [0], [0], [1], [0, 0, 1, 1], [], []>} : vector<8x8xf32>, vector<8x8xf32>, vector<8x8xf32> -> vector<8x8xf32>
    %cst_55 = arith.constant dense<0.000000e+00> : vector<8xf32>
    %139 = vector.multi_reduction <add>, %138, %cst_55 [1] : vector<8x8xf32> to vector<8xf32>
    %140 = vector.shape_cast %139 : vector<8xf32> to vector<8x1xf32>
    %cst_56 = arith.constant 8.000000e+00 : f32
    %141 = vector.broadcast %cst_56 : f32 to vector<8x1xf32>
    %142 = arith.divf %140, %141 : vector<8x1xf32>
    %143 = vector.broadcast %142 : vector<8x1xf32> to vector<8x8xf32>
    %144 = arith.subf %138, %143 : vector<8x8xf32>
    %145 = arith.mulf %144, %144 : vector<8x8xf32>
    %cst_57 = arith.constant dense<0.000000e+00> : vector<8xf32>
    %146 = vector.multi_reduction <add>, %145, %cst_57 [1] : vector<8x8xf32> to vector<8xf32>
    %147 = vector.shape_cast %146 : vector<8xf32> to vector<8x1xf32>
    %cst_58 = arith.constant 8.000000e+00 : f32
    %148 = vector.broadcast %cst_58 : f32 to vector<8x1xf32>
    %149 = arith.divf %147, %148 : vector<8x1xf32>
    %150 = vector.broadcast %142 : vector<8x1xf32> to vector<8x8xf32>
    %151 = arith.subf %138, %150 : vector<8x8xf32>
    %cst_59 = arith.constant 9.99999974E-6 : f32
    %152 = vector.broadcast %cst_59 : f32 to vector<8x1xf32>
    %153 = arith.addf %149, %152 : vector<8x1xf32>
    %154 = math.rsqrt %153 : vector<8x1xf32>
    %155 = vector.broadcast %154 : vector<8x1xf32> to vector<8x8xf32>
    %156 = arith.mulf %151, %155 : vector<8x8xf32>
    %c0_60 = arith.constant 0 : index
    %c8 = arith.constant 8 : index
    %157 = vector.load %arg9[%c0_60, %c8] : memref<1x32xf32, #tpu.memory_space<vmem>>, vector<1x8xf32>
    %158 = vector.broadcast %157 : vector<1x8xf32> to vector<8x8xf32>
    %159 = arith.mulf %156, %158 : vector<8x8xf32>
    %c0_61 = arith.constant 0 : index
    %c0_62 = arith.constant 0 : index
    %c8_63 = arith.constant 8 : index
    %160 = vector.load %arg10[%c0_61, %c0_62, %c8_63] : memref<1x8x32xf32, #tpu.memory_space<vmem>>, vector<1x8x8xf32>
    %161 = vector.shape_cast %160 : vector<1x8x8xf32> to vector<8x8xf32>
    %162 = vector.shape_cast %159 : vector<8x8xf32> to vector<1x8x8xf32>
    tpu.vector_store %arg10[%c0_61, %c0_62, %c8_63], %162 {strides = array<i32>} : memref<1x8x32xf32, #tpu.memory_space<vmem>>, vector<1x8x8xf32>,
    %163 = vector.extract_strided_slice %7 {offsets = [0, 16], sizes = [8, 8], strides = [1, 1]} : vector<8x32xf32> to vector<8x8xf32>
    %164 = vector.extract_strided_slice %9 {offsets = [0, 16], sizes = [8, 8], strides = [1, 1]} : vector<8x32xf32> to vector<8x8xf32>
    %165 = vector.extract_strided_slice %11 {offsets = [0, 16], sizes = [8, 8], strides = [1, 1]} : vector<8x32xf32> to vector<8x8xf32>
    %166 = vector.extract_strided_slice %40 {offsets = [0, 2], sizes = [8, 1], strides = [1, 1]} : vector<8x4xf32> to vector<8x1xf32>
    %167 = vector.extract_strided_slice %41 {offsets = [2, 0], sizes = [1, 8], strides = [1, 1]} : vector<4x8xf32> to vector<1x8xf32>
    %168 = vector.broadcast %166 : vector<8x1xf32> to vector<8x8xf32>
    %169 = vector.broadcast %167 : vector<1x8xf32> to vector<8x8xf32>
    %170 = arith.subf %168, %169 : vector<8x8xf32>
    %171 = vector.extract_strided_slice %42 {offsets = [2, 0], sizes = [1, 8], strides = [1, 1]} : vector<4x8xf32> to vector<1x8xf32>
    %172 = vector.broadcast %171 : vector<1x8xf32> to vector<8x8xf32>
    %173 = arith.addf %170, %172 : vector<8x8xf32>
    %cst_64 = arith.constant 0xFF800000 : f32
    %174 = vector.broadcast %cst_64 : f32 to vector<8x8xf32>
    %175 = arith.select %37, %173, %174 : vector<8x8xi1>, vector<8x8xf32>
    %cst_65 = arith.constant dense<0xFF800000> : vector<8xf32>
    %176 = vector.multi_reduction <maximumf>, %175, %cst_65 [1] : vector<8x8xf32> to vector<8xf32>
    %177 = vector.shape_cast %176 : vector<8xf32> to vector<8x1xf32>
    %178 = tpu.transpose %164, [1, 0] : vector<8x8xf32> -> vector<8x8xf32>
    %cst_66 = arith.constant dense<0.000000e+00> : vector<8x8xf32>
    %179 = tpu.matmul %163, %178, %cst_66 {dimension_numbers = #tpu.dot_dimension_numbers<[1], [0], [0], [1], [0, 0, 1, 1], [], []>} : vector<8x8xf32>, vector<8x8xf32>, vector<8x8xf32> -> vector<8x8xf32>
    %cst_67 = arith.constant 0.353553385 : f32
    %180 = vector.broadcast %cst_67 : f32 to vector<8x8xf32>
    %181 = arith.mulf %179, %180 : vector<8x8xf32>
    %182 = vector.broadcast %177 : vector<8x1xf32> to vector<8x8xf32>
    %183 = arith.subf %175, %182 : vector<8x8xf32>
    %184 = math.exp %183 : vector<8x8xf32>
    %185 = arith.mulf %181, %184 : vector<8x8xf32>
    %cst_68 = arith.constant dense<0.000000e+00> : vector<8xf32>
    %186 = vector.multi_reduction <add>, %185, %cst_68 [1] : vector<8x8xf32> to vector<8xf32>
    %187 = vector.shape_cast %186 : vector<8xf32> to vector<8x1xf32>
    %188 = math.absf %187 : vector<8x1xf32>
    %cst_69 = arith.constant 0.000000e+00 : f32
    %189 = vector.broadcast %cst_69 : f32 to vector<8x1xf32>
    %190 = arith.subf %189, %177 : vector<8x1xf32>
    %191 = math.exp %190 : vector<8x1xf32>
    %192 = arith.maximumf %188, %191 : vector<8x1xf32>
    %cst_70 = arith.constant 9.99999993E-9 : f32
    %193 = vector.broadcast %cst_70 : f32 to vector<8x1xf32>
    %194 = arith.addf %192, %193 : vector<8x1xf32>
    %195 = tpu.reciprocal %194 {approx = true} : vector<8x1xf32> -> vector<8x1xf32>
    %196 = vector.broadcast %195 : vector<8x1xf32> to vector<8x8xf32>
    %197 = arith.mulf %185, %196 : vector<8x8xf32>
    %cst_71 = arith.constant dense<0.000000e+00> : vector<8x8xf32>
    %198 = tpu.matmul %197, %165, %cst_71 {dimension_numbers = #tpu.dot_dimension_numbers<[1], [0], [0], [1], [0, 0, 1, 1], [], []>} : vector<8x8xf32>, vector<8x8xf32>, vector<8x8xf32> -> vector<8x8xf32>
    %cst_72 = arith.constant dense<0.000000e+00> : vector<8xf32>
    %199 = vector.multi_reduction <add>, %198, %cst_72 [1] : vector<8x8xf32> to vector<8xf32>
    %200 = vector.shape_cast %199 : vector<8xf32> to vector<8x1xf32>
    %cst_73 = arith.constant 8.000000e+00 : f32
    %201 = vector.broadcast %cst_73 : f32 to vector<8x1xf32>
    %202 = arith.divf %200, %201 : vector<8x1xf32>
    %203 = vector.broadcast %202 : vector<8x1xf32> to vector<8x8xf32>
    %204 = arith.subf %198, %203 : vector<8x8xf32>
    %205 = arith.mulf %204, %204 : vector<8x8xf32>
    %cst_74 = arith.constant dense<0.000000e+00> : vector<8xf32>
    %206 = vector.multi_reduction <add>, %205, %cst_74 [1] : vector<8x8xf32> to vector<8xf32>
    %207 = vector.shape_cast %206 : vector<8xf32> to vector<8x1xf32>
    %cst_75 = arith.constant 8.000000e+00 : f32
    %208 = vector.broadcast %cst_75 : f32 to vector<8x1xf32>
    %209 = arith.divf %207, %208 : vector<8x1xf32>
    %210 = vector.broadcast %202 : vector<8x1xf32> to vector<8x8xf32>
    %211 = arith.subf %198, %210 : vector<8x8xf32>
    %cst_76 = arith.constant 9.99999974E-6 : f32
    %212 = vector.broadcast %cst_76 : f32 to vector<8x1xf32>
    %213 = arith.addf %209, %212 : vector<8x1xf32>
    %214 = math.rsqrt %213 : vector<8x1xf32>
    %215 = vector.broadcast %214 : vector<8x1xf32> to vector<8x8xf32>
    %216 = arith.mulf %211, %215 : vector<8x8xf32>
    %c0_77 = arith.constant 0 : index
    %c16 = arith.constant 16 : index
    %217 = vector.load %arg9[%c0_77, %c16] : memref<1x32xf32, #tpu.memory_space<vmem>>, vector<1x8xf32>
    %218 = vector.broadcast %217 : vector<1x8xf32> to vector<8x8xf32>
    %219 = arith.mulf %216, %218 : vector<8x8xf32>
    %c0_78 = arith.constant 0 : index
    %c0_79 = arith.constant 0 : index
    %c16_80 = arith.constant 16 : index
    %220 = vector.load %arg10[%c0_78, %c0_79, %c16_80] : memref<1x8x32xf32, #tpu.memory_space<vmem>>, vector<1x8x8xf32>
    %221 = vector.shape_cast %220 : vector<1x8x8xf32> to vector<8x8xf32>
    %222 = vector.shape_cast %219 : vector<8x8xf32> to vector<1x8x8xf32>
    tpu.vector_store %arg10[%c0_78, %c0_79, %c16_80], %222 {strides = array<i32>} : memref<1x8x32xf32, #tpu.memory_space<vmem>>, vector<1x8x8xf32>,
    %223 = vector.extract_strided_slice %7 {offsets = [0, 24], sizes = [8, 8], strides = [1, 1]} : vector<8x32xf32> to vector<8x8xf32>
    %224 = vector.extract_strided_slice %9 {offsets = [0, 24], sizes = [8, 8], strides = [1, 1]} : vector<8x32xf32> to vector<8x8xf32>
    %225 = vector.extract_strided_slice %11 {offsets = [0, 24], sizes = [8, 8], strides = [1, 1]} : vector<8x32xf32> to vector<8x8xf32>
    %226 = vector.extract_strided_slice %40 {offsets = [0, 3], sizes = [8, 1], strides = [1, 1]} : vector<8x4xf32> to vector<8x1xf32>
    %227 = vector.extract_strided_slice %41 {offsets = [3, 0], sizes = [1, 8], strides = [1, 1]} : vector<4x8xf32> to vector<1x8xf32>
    %228 = vector.broadcast %226 : vector<8x1xf32> to vector<8x8xf32>
    %229 = vector.broadcast %227 : vector<1x8xf32> to vector<8x8xf32>
    %230 = arith.subf %228, %229 : vector<8x8xf32>
    %231 = vector.extract_strided_slice %42 {offsets = [3, 0], sizes = [1, 8], strides = [1, 1]} : vector<4x8xf32> to vector<1x8xf32>
    %232 = vector.broadcast %231 : vector<1x8xf32> to vector<8x8xf32>
    %233 = arith.addf %230, %232 : vector<8x8xf32>
    %cst_81 = arith.constant 0xFF800000 : f32
    %234 = vector.broadcast %cst_81 : f32 to vector<8x8xf32>
    %235 = arith.select %37, %233, %234 : vector<8x8xi1>, vector<8x8xf32>
    %cst_82 = arith.constant dense<0xFF800000> : vector<8xf32>
    %236 = vector.multi_reduction <maximumf>, %235, %cst_82 [1] : vector<8x8xf32> to vector<8xf32>
    %237 = vector.shape_cast %236 : vector<8xf32> to vector<8x1xf32>
    %238 = tpu.transpose %224, [1, 0] : vector<8x8xf32> -> vector<8x8xf32>
    %cst_83 = arith.constant dense<0.000000e+00> : vector<8x8xf32>
    %239 = tpu.matmul %223, %238, %cst_83 {dimension_numbers = #tpu.dot_dimension_numbers<[1], [0], [0], [1], [0, 0, 1, 1], [], []>} : vector<8x8xf32>, vector<8x8xf32>, vector<8x8xf32> -> vector<8x8xf32>
    %cst_84 = arith.constant 0.353553385 : f32
    %240 = vector.broadcast %cst_84 : f32 to vector<8x8xf32>
    %241 = arith.mulf %239, %240 : vector<8x8xf32>
    %242 = vector.broadcast %237 : vector<8x1xf32> to vector<8x8xf32>
    %243 = arith.subf %235, %242 : vector<8x8xf32>
    %244 = math.exp %243 : vector<8x8xf32>
    %245 = arith.mulf %241, %244 : vector<8x8xf32>
    %cst_85 = arith.constant dense<0.000000e+00> : vector<8xf32>
    %246 = vector.multi_reduction <add>, %245, %cst_85 [1] : vector<8x8xf32> to vector<8xf32>
    %247 = vector.shape_cast %246 : vector<8xf32> to vector<8x1xf32>
    %248 = math.absf %247 : vector<8x1xf32>
    %cst_86 = arith.constant 0.000000e+00 : f32
    %249 = vector.broadcast %cst_86 : f32 to vector<8x1xf32>
    %250 = arith.subf %249, %237 : vector<8x1xf32>
    %251 = math.exp %250 : vector<8x1xf32>
    %252 = arith.maximumf %248, %251 : vector<8x1xf32>
    %cst_87 = arith.constant 9.99999993E-9 : f32
    %253 = vector.broadcast %cst_87 : f32 to vector<8x1xf32>
    %254 = arith.addf %252, %253 : vector<8x1xf32>
    %255 = tpu.reciprocal %254 {approx = true} : vector<8x1xf32> -> vector<8x1xf32>
    %256 = vector.broadcast %255 : vector<8x1xf32> to vector<8x8xf32>
    %257 = arith.mulf %245, %256 : vector<8x8xf32>
    %cst_88 = arith.constant dense<0.000000e+00> : vector<8x8xf32>
    %258 = tpu.matmul %257, %225, %cst_88 {dimension_numbers = #tpu.dot_dimension_numbers<[1], [0], [0], [1], [0, 0, 1, 1], [], []>} : vector<8x8xf32>, vector<8x8xf32>, vector<8x8xf32> -> vector<8x8xf32>
    %cst_89 = arith.constant dense<0.000000e+00> : vector<8xf32>
    %259 = vector.multi_reduction <add>, %258, %cst_89 [1] : vector<8x8xf32> to vector<8xf32>
    %260 = vector.shape_cast %259 : vector<8xf32> to vector<8x1xf32>
    %cst_90 = arith.constant 8.000000e+00 : f32
    %261 = vector.broadcast %cst_90 : f32 to vector<8x1xf32>
    %262 = arith.divf %260, %261 : vector<8x1xf32>
    %263 = vector.broadcast %262 : vector<8x1xf32> to vector<8x8xf32>
    %264 = arith.subf %258, %263 : vector<8x8xf32>
    %265 = arith.mulf %264, %264 : vector<8x8xf32>
    %cst_91 = arith.constant dense<0.000000e+00> : vector<8xf32>
    %266 = vector.multi_reduction <add>, %265, %cst_91 [1] : vector<8x8xf32> to vector<8xf32>
    %267 = vector.shape_cast %266 : vector<8xf32> to vector<8x1xf32>
    %cst_92 = arith.constant 8.000000e+00 : f32
    %268 = vector.broadcast %cst_92 : f32 to vector<8x1xf32>
    %269 = arith.divf %267, %268 : vector<8x1xf32>
    %270 = vector.broadcast %262 : vector<8x1xf32> to vector<8x8xf32>
    %271 = arith.subf %258, %270 : vector<8x8xf32>
    %cst_93 = arith.constant 9.99999974E-6 : f32
    %272 = vector.broadcast %cst_93 : f32 to vector<8x1xf32>
    %273 = arith.addf %269, %272 : vector<8x1xf32>
    %274 = math.rsqrt %273 : vector<8x1xf32>
    %275 = vector.broadcast %274 : vector<8x1xf32> to vector<8x8xf32>
    %276 = arith.mulf %271, %275 : vector<8x8xf32>
    %c0_94 = arith.constant 0 : index
    %c24 = arith.constant 24 : index
    %277 = vector.load %arg9[%c0_94, %c24] : memref<1x32xf32, #tpu.memory_space<vmem>>, vector<1x8xf32>
    %278 = vector.broadcast %277 : vector<1x8xf32> to vector<8x8xf32>
    %279 = arith.mulf %276, %278 : vector<8x8xf32>
    %c0_95 = arith.constant 0 : index
    %c0_96 = arith.constant 0 : index
    %c24_97 = arith.constant 24 : index
    %280 = vector.load %arg10[%c0_95, %c0_96, %c24_97] : memref<1x8x32xf32, #tpu.memory_space<vmem>>, vector<1x8x8xf32>
    %281 = vector.shape_cast %280 : vector<1x8x8xf32> to vector<8x8xf32>
    %282 = vector.shape_cast %279 : vector<8x8xf32> to vector<1x8x8xf32>
    tpu.vector_store %arg10[%c0_95, %c0_96, %c24_97], %282 {strides = array<i32>} : memref<1x8x32xf32, #tpu.memory_space<vmem>>, vector<1x8x8xf32>,
    return
  }
  func.func @transform_0(%arg0: i32) -> (i32, i32, i32) {
    %c0_i32 = arith.constant 0 : i32
    %c0_i32_0 = arith.constant 0 : i32
    %c0_i32_1 = arith.constant 0 : i32
    return %arg0, %c0_i32, %c0_i32_0 : i32, i32, i32
  }
  func.func @transform_1(%arg0: i32) -> (i32, i32, i32) {
    %c0_i32 = arith.constant 0 : i32
    %c0_i32_0 = arith.constant 0 : i32
    %c0_i32_1 = arith.constant 0 : i32
    return %arg0, %c0_i32, %c0_i32_0 : i32, i32, i32
  }
  func.func @transform_2(%arg0: i32) -> (i32, i32, i32) {
    %c0_i32 = arith.constant 0 : i32
    %c0_i32_0 = arith.constant 0 : i32
    %c0_i32_1 = arith.constant 0 : i32
    return %arg0, %c0_i32, %c0_i32_0 : i32, i32, i32
  }
  func.func @transform_3(%arg0: i32) -> (i32, i32) {
    %c0_i32 = arith.constant 0 : i32
    %c0_i32_0 = arith.constant 0 : i32
    %c0_i32_1 = arith.constant 0 : i32
    return %c0_i32, %c0_i32_0 : i32, i32
  }
  func.func @transform_4(%arg0: i32) -> (i32, i32) {
    %c0_i32 = arith.constant 0 : i32
    %c0_i32_0 = arith.constant 0 : i32
    %c0_i32_1 = arith.constant 0 : i32
    return %c0_i32, %c0_i32_0 : i32, i32
  }
  func.func @transform_5(%arg0: i32) -> (i32, i32) {
    %c0_i32 = arith.constant 0 : i32
    %c0_i32_0 = arith.constant 0 : i32
    %c0_i32_1 = arith.constant 0 : i32
    return %c0_i32, %c0_i32_0 : i32, i32
  }
  func.func @transform_6(%arg0: i32) -> (i32, i32) {
    %c0_i32 = arith.constant 0 : i32
    %c0_i32_0 = arith.constant 0 : i32
    %c0_i32_1 = arith.constant 0 : i32
    return %c0_i32, %c0_i32_0 : i32, i32
  }
  func.func @transform_7(%arg0: i32) -> (i32, i32) {
    %c0_i32 = arith.constant 0 : i32
    %c0_i32_0 = arith.constant 0 : i32
    %c0_i32_1 = arith.constant 0 : i32
    return %c0_i32, %c0_i32_0 : i32, i32
  }
  func.func @transform_8(%arg0: i32) -> (i32, i32) {
    %c0_i32 = arith.constant 0 : i32
    %c0_i32_0 = arith.constant 0 : i32
    %c0_i32_1 = arith.constant 0 : i32
    return %c0_i32, %c0_i32_0 : i32, i32
  }
  func.func @transform_9(%arg0: i32) -> (i32, i32, i32) {
    %c0_i32 = arith.constant 0 : i32
    %c0_i32_0 = arith.constant 0 : i32
    %c0_i32_1 = arith.constant 0 : i32
    return %arg0, %c0_i32, %c0_i32_0 : i32, i32, i32
  }
}

</mosaic_0001>

<llo_original>
// kernel: tpu_custom_call.1
$region0: #{tpu_custom_call.1}
  #allocation0 [shape = 'u32[]', space=smem, size = 0x4, offset = 0x4, fixed_abs, tag = 'smem constant byte address 0x4 - core index']
  #allocation1 [shape = 'u32[72,128]{1,0:T(1,128)}', space=vmem, size = 0x9000, scoped, tag = 'internal scratch']
  %s0 = inlined_call_operand.hbm [shape: f32[2,8,32], index: 0, kind: input, shape index: {}]
  %s1 = inlined_call_operand.hbm [shape: f32[2,8,32], index: 1, kind: input, shape index: {}]
  %s2 = inlined_call_operand.hbm [shape: f32[2,8,32], index: 2, kind: input, shape index: {}]
  %s3 = inlined_call_operand.vmem [shape: f32[32,32], index: 3, kind: input, shape index: {}]
  %s4 = inlined_call_operand.vmem [shape: f32[32,32], index: 4, kind: input, shape index: {}]
  %s5 = inlined_call_operand.vmem [shape: f32[32,32], index: 5, kind: input, shape index: {}]
  %s6 = inlined_call_operand.vmem [shape: f32[96,8], index: 6, kind: input, shape index: {}]
  %s7 = inlined_call_operand.vmem [shape: f32[1,8], index: 7, kind: input, shape index: {}]
  %s8 = inlined_call_operand.vmem [shape: f32[1,32], index: 8, kind: input, shape index: {}]
  %s9 = inlined_call_operand.hbm [shape: f32[2,8,32], index: 9, kind: output, shape index: {}]
  %s10 = sld [smem:[#allocation0]]
  $region81: #{tpu_custom_call.1} parent=0
    _
  %s12 = ssub.s32 1, %s10
  %s13 = scalar_select 0, %s12, %s10
  $region1: #{tpu_custom_call.1} parent=0
    #allocation2 [shape = 'u8[8192]{0}', space=vmem, size = 0x2000, scoped, tag = 'input window, operand 0']
    #allocation3 [shape = 's32[2]{0}', space=sflag, size = 0x8, scoped, tag = 'scoped memory for tpu_custom_call.1']
    #allocation4 [shape = 's32[2]{0}', space=sflag, size = 0x8, scoped, tag = 'scoped memory for tpu_custom_call.1']
    #allocation5 [shape = 'u8[8192]{0}', space=vmem, size = 0x2000, scoped, tag = 'input window, operand 1']
    #allocation6 [shape = 's32[2]{0}', space=sflag, size = 0x8, scoped, tag = 'scoped memory for tpu_custom_call.1']
    #allocation7 [shape = 'u8[8192]{0}', space=vmem, size = 0x2000, scoped, tag = 'input window, operand 2']
    #allocation8 [shape = 'u8[8192]{0}', space=vmem, size = 0x2000, scoped, tag = 'output window, operand 0']
    %14 = vsyncpa [#allocation3], 0
    %s15 = scalar_lea.sflag [#allocation3], 1
    %16 = vsyncpa %s15, 0
    %17 = vsyncpa [#allocation6], 0
    %s18 = scalar_lea.sflag [#allocation6], 1
    %19 = vsyncpa %s18, 0
    %20 = vsyncpa [#allocation4], 0
    %s21 = scalar_lea.sflag [#allocation4], 1
    %22 = vsyncpa %s21, 0
    loop: start=0, step=1, limit=4
    $region2: #{tpu_custom_call.1} parent=1 // loop_pre_header
      _
    $region3: #{tpu_custom_call.1} parent=1 // loop_header
      %s24 = sphi 0, %s28
      %p25 = scmp.ge.s32.totalorder %s24, 4
      %s34 = sphi 0, %s36
      %s37 = sphi 0, %s34
      %s38 = sphi 0, %s37
      %s54 = sphi 0, %s38
      %s60 = sphi 0, %s62
      %s63 = sphi 0, %s60
      %s64 = sphi 0, %s63
      %s80 = sphi 0, %s64
      %s86 = sphi 0, %s88
      %s89 = sphi 0, %s86
      %s90 = sphi 0, %s89
      %s106 = sphi 0, %s90
      %s110 = sphi 0, %s110
      %s112 = sphi 0, %s110
      %s113 = sphi 0, %s112
      %s127 = sphi 0, %s113
      %s131 = sphi 0, %s131
      %s133 = sphi 0, %s131
      %s134 = sphi 0, %s133
      %s148 = sphi 0, %s134
      %s152 = sphi 0, %s152
      %s154 = sphi 0, %s152
      %s155 = sphi 0, %s154
      %s169 = sphi 0, %s155
      %s173 = sphi 0, %s173
      %s175 = sphi 0, %s173
      %s176 = sphi 0, %s175
      %s190 = sphi 0, %s176
      %s194 = sphi 0, %s194
      %s196 = sphi 0, %s194
      %s197 = sphi 0, %s196
      %s211 = sphi 0, %s197
      %s215 = sphi 0, %s215
      %s217 = sphi 0, %s215
      %s218 = sphi 0, %s217
      %s232 = sphi 0, %s218
      %s238 = sphi 0, %s240
      %s241 = sphi 0, %s238
      %s242 = sphi 0, %s241
      %s258 = sphi 0, %s242
    $region4: #{tpu_custom_call.1} parent=1 // loop_header_branch
      %27 = sbr.rel (%p25) target = $region8
    $region5: #{tpu_custom_call.1} parent=1 // loop_body
      %s29 = ssub.s32 %s24, 1
      %s30 = ssub.s32 %s24, 2
      %s31 = sadd.s32 %s24, 1
      %s32 = ssub.s32 %s24, %s31
      %p33 = scmp.eq.s32.totalorder %s32, 0
      %s35 = sadd.s32 %s34, 1
      %s36 = scalar_select %p33, %s34, %s35
      %p39 = pneg %p33
      %p40 = scmp.eq.s32.totalorder %s24, 1
      %p41 = por %p39, %p40
      %p42 = scmp.ne.s32.totalorder %s34, %s37
      %p43 = scmp.eq.s32.totalorder %s24, 0
      %p44 = por %p42, %p43
      %p45 = scmp.ne.s32.totalorder %s34, %s37
      %p46 = scmp.eq.s32.totalorder %s29, 1
      %p47 = por %p45, %p46
      %p48 = scmp.ne.s32.totalorder %s37, %s38
      %p49 = scmp.eq.s32.totalorder %s29, 0
      %p50 = por %p48, %p49
      %p51 = scmp.ne.s32.totalorder %s37, %s38
      %p52 = scmp.eq.s32.totalorder %s30, 1
      %p53 = por %p51, %p52
      %p55 = scmp.ne.s32.totalorder %s38, %s54
      %p56 = scmp.eq.s32.totalorder %s30, 0
      %p57 = por %p55, %p56
      %s58 = ssub.s32 %s24, %s31
      %p59 = scmp.eq.s32.totalorder %s58, 0
      %s61 = sadd.s32 %s60, 1
      %s62 = scalar_select %p59, %s60, %s61
      %p65 = pneg %p59
      %p66 = scmp.eq.s32.totalorder %s24, 1
      %p67 = por %p65, %p66
      %p68 = scmp.ne.s32.totalorder %s60, %s63
      %p69 = scmp.eq.s32.totalorder %s24, 0
      %p70 = por %p68, %p69
      %p71 = scmp.ne.s32.totalorder %s60, %s63
      %p72 = scmp.eq.s32.totalorder %s29, 1
      %p73 = por %p71, %p72
      %p74 = scmp.ne.s32.totalorder %s63, %s64
      %p75 = scmp.eq.s32.totalorder %s29, 0
      %p76 = por %p74, %p75
      %p77 = scmp.ne.s32.totalorder %s63, %s64
      %p78 = scmp.eq.s32.totalorder %s30, 1
      %p79 = por %p77, %p78
      %p81 = scmp.ne.s32.totalorder %s64, %s80
      %p82 = scmp.eq.s32.totalorder %s30, 0
      %p83 = por %p81, %p82
      %s84 = ssub.s32 %s24, %s31
      %p85 = scmp.eq.s32.totalorder %s84, 0
      %s87 = sadd.s32 %s86, 1
      %s88 = scalar_select %p85, %s86, %s87
      %p91 = pneg %p85
      %p92 = scmp.eq.s32.totalorder %s24, 1
      %p93 = por %p91, %p92
      %p94 = scmp.ne.s32.totalorder %s86, %s89
      %p95 = scmp.eq.s32.totalorder %s24, 0
      %p96 = por %p94, %p95
      %p97 = scmp.ne.s32.totalorder %s86, %s89
      %p98 = scmp.eq.s32.totalorder %s29, 1
      %p99 = por %p97, %p98
      %p100 = scmp.ne.s32.totalorder %s89, %s90
      %p101 = scmp.eq.s32.totalorder %s29, 0
      %p102 = por %p100, %p101
      %p103 = scmp.ne.s32.totalorder %s89, %s90
      %p104 = scmp.eq.s32.totalorder %s30, 1
      %p105 = por %p103, %p104
      %p107 = scmp.ne.s32.totalorder %s90, %s106
      %p108 = scmp.eq.s32.totalorder %s30, 0
      %p109 = por %p107, %p108
      %s111 = sadd.s32 %s110, 1
      %p114 = scmp.eq.s32.totalorder %s24, 1
      %p115 = scmp.ne.s32.totalorder %s110, %s112
      %p116 = scmp.eq.s32.totalorder %s24, 0
      %p117 = por %p115, %p116
      %p118 = scmp.ne.s32.totalorder %s110, %s112
      %p119 = scmp.eq.s32.totalorder %s29, 1
      %p120 = por %p118, %p119
      %p121 = scmp.ne.s32.totalorder %s112, %s113
      %p122 = scmp.eq.s32.totalorder %s29, 0
      %p123 = por %p121, %p122
      %p124 = scmp.ne.s32.totalorder %s112, %s113
      %p125 = scmp.eq.s32.totalorder %s30, 1
      %p126 = por %p124, %p125
      %p128 = scmp.ne.s32.totalorder %s113, %s127
      %p129 = scmp.eq.s32.totalorder %s30, 0
      %p130 = por %p128, %p129
      %s132 = sadd.s32 %s131, 1
      %p135 = scmp.eq.s32.totalorder %s24, 1
      %p136 = scmp.ne.s32.totalorder %s131, %s133
      %p137 = scmp.eq.s32.totalorder %s24, 0
      %p138 = por %p136, %p137
      %p139 = scmp.ne.s32.totalorder %s131, %s133
      %p140 = scmp.eq.s32.totalorder %s29, 1
      %p141 = por %p139, %p140
      %p142 = scmp.ne.s32.totalorder %s133, %s134
      %p143 = scmp.eq.s32.totalorder %s29, 0
      %p144 = por %p142, %p143
      %p145 = scmp.ne.s32.totalorder %s133, %s134
      %p146 = scmp.eq.s32.totalorder %s30, 1
      %p147 = por %p145, %p146
      %p149 = scmp.ne.s32.totalorder %s134, %s148
      %p150 = scmp.eq.s32.totalorder %s30, 0
      %p151 = por %p149, %p150
      %s153 = sadd.s32 %s152, 1
      %p156 = scmp.eq.s32.totalorder %s24, 1
      %p157 = scmp.ne.s32.totalorder %s152, %s154
      %p158 = scmp.eq.s32.totalorder %s24, 0
      %p159 = por %p157, %p158
      %p160 = scmp.ne.s32.totalorder %s152, %s154
      %p161 = scmp.eq.s32.totalorder %s29, 1
      %p162 = por %p160, %p161
      %p163 = scmp.ne.s32.totalorder %s154, %s155
      %p164 = scmp.eq.s32.totalorder %s29, 0
      %p165 = por %p163, %p164
      %p166 = scmp.ne.s32.totalorder %s154, %s155
      %p167 = scmp.eq.s32.totalorder %s30, 1
      %p168 = por %p166, %p167
      %p170 = scmp.ne.s32.totalorder %s155, %s169
      %p171 = scmp.eq.s32.totalorder %s30, 0
      %p172 = por %p170, %p171
      %s174 = sadd.s32 %s173, 1
      %p177 = scmp.eq.s32.totalorder %s24, 1
      %p178 = scmp.ne.s32.totalorder %s173, %s175
      %p179 = scmp.eq.s32.totalorder %s24, 0
      %p180 = por %p178, %p179
      %p181 = scmp.ne.s32.totalorder %s173, %s175
      %p182 = scmp.eq.s32.totalorder %s29, 1
      %p183 = por %p181, %p182
      %p184 = scmp.ne.s32.totalorder %s175, %s176
      %p185 = scmp.eq.s32.totalorder %s29, 0
      %p186 = por %p184, %p185
      %p187 = scmp.ne.s32.totalorder %s175, %s176
      %p188 = scmp.eq.s32.totalorder %s30, 1
      %p189 = por %p187, %p188
      %p191 = scmp.ne.s32.totalorder %s176, %s190
      %p192 = scmp.eq.s32.totalorder %s30, 0
      %p193 = por %p191, %p192
      %s195 = sadd.s32 %s194, 1
      %p198 = scmp.eq.s32.totalorder %s24, 1
      %p199 = scmp.ne.s32.totalorder %s194, %s196
      %p200 = scmp.eq.s32.totalorder %s24, 0
      %p201 = por %p199, %p200
      %p202 = scmp.ne.s32.totalorder %s194, %s196
      %p203 = scmp.eq.s32.totalorder %s29, 1
      %p204 = por %p202, %p203
      %p205 = scmp.ne.s32.totalorder %s196, %s197
      %p206 = scmp.eq.s32.totalorder %s29, 0
      %p207 = por %p205, %p206
      %p208 = scmp.ne.s32.totalorder %s196, %s197
      %p209 = scmp.eq.s32.totalorder %s30, 1
      %p210 = por %p208, %p209
      %p212 = scmp.ne.s32.totalorder %s197, %s211
      %p213 = scmp.eq.s32.totalorder %s30, 0
      %p214 = por %p212, %p213
      %s216 = sadd.s32 %s215, 1
      %p219 = scmp.eq.s32.totalorder %s24, 1
      %p220 = scmp.ne.s32.totalorder %s215, %s217
      %p221 = scmp.eq.s32.totalorder %s24, 0
      %p222 = por %p220, %p221
      %p223 = scmp.ne.s32.totalorder %s215, %s217
      %p224 = scmp.eq.s32.totalorder %s29, 1
      %p225 = por %p223, %p224
      %p226 = scmp.ne.s32.totalorder %s217, %s218
      %p227 = scmp.eq.s32.totalorder %s29, 0
      %p228 = por %p226, %p227
      %p229 = scmp.ne.s32.totalorder %s217, %s218
      %p230 = scmp.eq.s32.totalorder %s30, 1
      %p231 = por %p229, %p230
      %p233 = scmp.ne.s32.totalorder %s218, %s232
      %p234 = scmp.eq.s32.totalorder %s30, 0
      %p235 = por %p233, %p234
      %s236 = ssub.s32 %s24, %s31
      %p237 = scmp.eq.s32.totalorder %s236, 0
      %s239 = sadd.s32 %s238, 1
      %s240 = scalar_select %p237, %s238, %s239
      %p243 = pneg %p237
      %p244 = scmp.eq.s32.totalorder %s24, 1
      %p245 = por %p243, %p244
      %p246 = scmp.ne.s32.totalorder %s238, %s241
      %p247 = scmp.eq.s32.totalorder %s24, 0
      %p248 = por %p246, %p247
      %p249 = scmp.ne.s32.totalorder %s238, %s241
      %p250 = scmp.eq.s32.totalorder %s29, 1
      %p251 = por %p249, %p250
      %p252 = scmp.ne.s32.totalorder %s241, %s242
      %p253 = scmp.eq.s32.totalorder %s29, 0
      %p254 = por %p252, %p253
      %p255 = scmp.ne.s32.totalorder %s241, %s242
      %p256 = scmp.eq.s32.totalorder %s30, 1
      %p257 = por %p255, %p256
      %p259 = scmp.ne.s32.totalorder %s242, %s258
      %p260 = scmp.eq.s32.totalorder %s30, 0
      %p261 = por %p259, %p260
      %p262 = scmp.le.s32.totalorder 1, %s24
      %p263 = scmp.lt.s32.totalorder %s24, 3
      %p264 = pnand %p262, %p263
      %p265 = pneg %p264
      // Predicated region
      $region9: #{tpu_custom_call.1} parent=5 // pred_check
        _
      $region10: #{tpu_custom_call.1} parent=5 // pred_check_branch
        %267 = sbr.rel (%p264) target = $region12
      $region11: #{tpu_custom_call.1} parent=5 // pred_region
        %s268 = ssub.s32 %s24, 1
        // Predicated region
        $region13: #{tpu_custom_call.1} parent=11 // pred_check
          %p269 = pneg %p123
        $region14: #{tpu_custom_call.1} parent=11 // pred_check_branch
          %271 = sbr.rel (%p269) target = $region16
        $region15: #{tpu_custom_call.1} parent=11 // pred_region
          _
        $region16: #{tpu_custom_call.1} parent=11 // pred_fallthru
          _
        // Predicated region
        $region17: #{tpu_custom_call.1} parent=11 // pred_check
          %p272 = pneg %p144
        $region18: #{tpu_custom_call.1} parent=11 // pred_check_branch
          %274 = sbr.rel (%p272) target = $region20
        $region19: #{tpu_custom_call.1} parent=11 // pred_region
          _
        $region20: #{tpu_custom_call.1} parent=11 // pred_fallthru
          _
        // Predicated region
        $region21: #{tpu_custom_call.1} parent=11 // pred_check
          %p275 = pneg %p165
        $region22: #{tpu_custom_call.1} parent=11 // pred_check_branch
          %277 = sbr.rel (%p275) target = $region24
        $region23: #{tpu_custom_call.1} parent=11 // pred_region
          _
        $region24: #{tpu_custom_call.1} parent=11 // pred_fallthru
          _
        // Predicated region
        $region25: #{tpu_custom_call.1} parent=11 // pred_check
          %p278 = pneg %p186
        $region26: #{tpu_custom_call.1} parent=11 // pred_check_branch
          %280 = sbr.rel (%p278) target = $region28
        $region27: #{tpu_custom_call.1} parent=11 // pred_region
          _
        $region28: #{tpu_custom_call.1} parent=11 // pred_fallthru
          _
        // Predicated region
        $region29: #{tpu_custom_call.1} parent=11 // pred_check
          %p281 = pneg %p207
        $region30: #{tpu_custom_call.1} parent=11 // pred_check_branch
          %283 = sbr.rel (%p281) target = $region32
        $region31: #{tpu_custom_call.1} parent=11 // pred_region
          _
        $region32: #{tpu_custom_call.1} parent=11 // pred_fallthru
          _
        // Predicated region
        $region33: #{tpu_custom_call.1} parent=11 // pred_check
          %p284 = pneg %p228
        $region34: #{tpu_custom_call.1} parent=11 // pred_check_branch
          %286 = sbr.rel (%p284) target = $region36
        $region35: #{tpu_custom_call.1} parent=11 // pred_region
          _
        $region36: #{tpu_custom_call.1} parent=11 // pred_fallthru
          _
      $region12: #{tpu_custom_call.1} parent=5 // pred_fallthru
        _
      %p287 = scmp.lt.s32.totalorder %s24, 2
      // Predicated region
      $region37: #{tpu_custom_call.1} parent=5 // pred_check
        %p288 = pneg %p287
      $region38: #{tpu_custom_call.1} parent=5 // pred_check_branch
        %290 = sbr.rel (%p288) target = $region40
      $region39: #{tpu_custom_call.1} parent=5 // pred_region
        // Predicated region
        $region41: #{tpu_custom_call.1} parent=39 // pred_check
          %p291 = pneg %p44
        $region42: #{tpu_custom_call.1} parent=39 // pred_check_branch
          %293 = sbr.rel (%p291) target = $region44
        $region43: #{tpu_custom_call.1} parent=39 // pred_region
          %s294 = sand.u32 %s34, 1
          %s295 = scalar_lea.sflag [#allocation3], %s294
          %s296 = sand.u32 %s34, 1
          %s297 = smul.addr %s296, 8
          %s298 = scalar_lea.vmem [#allocation2], %s297
          %300 = vsyncadd %s295, 0
          %s301 = smul.addr %s24, 8
          %s302 = scalar_lea.hbm %s0, %s301
          %s304 = sshll.u32 %s302, 4
          %s305 = int_to_ptr.hbm [resolvable:$true] %s304
          %s306 = sshll.u32 %s298, 4
          %s307 = int_to_ptr.vmem [resolvable:$true] %s306
          %309 = dma.hbm_to_vmem [thread:$0]  %s305, 128, %s307, %s295
        $region44: #{tpu_custom_call.1} parent=39 // pred_fallthru
          _
        // Predicated region
        $region45: #{tpu_custom_call.1} parent=39 // pred_check
          %p310 = pneg %p70
        $region46: #{tpu_custom_call.1} parent=39 // pred_check_branch
          %312 = sbr.rel (%p310) target = $region48
        $region47: #{tpu_custom_call.1} parent=39 // pred_region
          %s313 = sand.u32 %s24, 1
          %s314 = scalar_lea.sflag [#allocation6], %s313
          %s315 = sand.u32 %s60, 1
          %s316 = smul.addr %s315, 8
          %s317 = scalar_lea.vmem [#allocation5], %s316
          %319 = vsyncadd %s314, 0
          %s320 = smul.addr %s24, 8
          %s321 = scalar_lea.hbm %s1, %s320
          %s323 = sshll.u32 %s321, 4
          %s324 = int_to_ptr.hbm [resolvable:$true] %s323
          %s325 = sshll.u32 %s317, 4
          %s326 = int_to_ptr.vmem [resolvable:$true] %s325
          %328 = dma.hbm_to_vmem [thread:$0]  %s324, 128, %s326, %s314
        $region48: #{tpu_custom_call.1} parent=39 // pred_fallthru
          _
        // Predicated region
        $region49: #{tpu_custom_call.1} parent=39 // pred_check
          %p329 = pneg %p96
        $region50: #{tpu_custom_call.1} parent=39 // pred_check_branch
          %331 = sbr.rel (%p329) target = $region52
        $region51: #{tpu_custom_call.1} parent=39 // pred_region
          %s332 = sand.u32 %s24, 1
          %s333 = scalar_lea.sflag [#allocation6], %s332
          %s334 = sand.u32 %s86, 1
          %s335 = smul.addr %s334, 8
          %s336 = scalar_lea.vmem [#allocation7], %s335
          %338 = vsyncadd %s333, 0
          %s339 = smul.addr %s24, 8
          %s340 = scalar_lea.hbm %s2, %s339
          %s342 = sshll.u32 %s340, 4
          %s343 = int_to_ptr.hbm [resolvable:$true] %s342
          %s344 = sshll.u32 %s336, 4
          %s345 = int_to_ptr.vmem [resolvable:$true] %s344
          %347 = dma.hbm_to_vmem [thread:$0]  %s343, 128, %s345, %s333
        $region52: #{tpu_custom_call.1} parent=39 // pred_fallthru
          _
      $region40: #{tpu_custom_call.1} parent=5 // pred_fallthru
        _
      %p348 = scmp.le.s32.totalorder 1, %s24
      %p349 = scmp.lt.s32.totalorder %s24, 3
      %p350 = pnand %p348, %p349
      %p351 = pneg %p350
      // Predicated region
      $region53: #{tpu_custom_call.1} parent=5 // pred_check
        _
      $region54: #{tpu_custom_call.1} parent=5 // pred_check_branch
        %353 = sbr.rel (%p350) target = $region56
      $region55: #{tpu_custom_call.1} parent=5 // pred_region
        %s354 = ssub.s32 %s24, 1
        %s355 = sand.u32 %s37, 1
        %s356 = scalar_lea.sflag [#allocation3], %s355
        %s357 = sand.u32 %s37, 1
        %s358 = smul.addr %s357, 8
        %s359 = scalar_lea.vmem [#allocation2], %s358
        // Predicated region
        $region57: #{tpu_custom_call.1} parent=55 // pred_check
          %p360 = pneg %p50
        $region58: #{tpu_custom_call.1} parent=55 // pred_check_branch
          %362 = sbr.rel (%p360) target = $region60
        $region59: #{tpu_custom_call.1} parent=55 // pred_region
          %364 = dma.done %s356, 128
        $region60: #{tpu_custom_call.1} parent=55 // pred_fallthru
          _
        %s365 = sand.u32 %s29, 1
        %s366 = scalar_lea.sflag [#allocation6], %s365
        %s367 = sand.u32 %s63, 1
        %s368 = smul.addr %s367, 8
        %s369 = scalar_lea.vmem [#allocation5], %s368
        // Predicated region
        $region61: #{tpu_custom_call.1} parent=55 // pred_check
          %p370 = pneg %p76
        $region62: #{tpu_custom_call.1} parent=55 // pred_check_branch
          %372 = sbr.rel (%p370) target = $region64
        $region63: #{tpu_custom_call.1} parent=55 // pred_region
          %374 = dma.done %s366, 128
        $region64: #{tpu_custom_call.1} parent=55 // pred_fallthru
          _
        %s375 = sand.u32 %s29, 1
        %s376 = scalar_lea.sflag [#allocation6], %s375
        %s377 = sand.u32 %s89, 1
        %s378 = smul.addr %s377, 8
        %s379 = scalar_lea.vmem [#allocation7], %s378
        // Predicated region
        $region65: #{tpu_custom_call.1} parent=55 // pred_check
          %p380 = pneg %p102
        $region66: #{tpu_custom_call.1} parent=55 // pred_check_branch
          %382 = sbr.rel (%p380) target = $region68
        $region67: #{tpu_custom_call.1} parent=55 // pred_region
          %384 = dma.done %s376, 128
        $region68: #{tpu_custom_call.1} parent=55 // pred_fallthru
          _
        %s385 = sand.u32 %s37, 1
        %s386 = scalar_lea.sflag [#allocation3], %s385
        %s387 = sand.u32 %s37, 1
        %s388 = smul.addr %s387, 8
        %s389 = scalar_lea.vmem [#allocation2], %s388
        %p390 = pneg %p50
        %p391 = pneg %p47
        %s392 = sand.u32 %s29, 1
        %s393 = scalar_lea.sflag [#allocation6], %s392
        %s394 = sand.u32 %s63, 1
        %s395 = smul.addr %s394, 8
        %s396 = scalar_lea.vmem [#allocation5], %s395
        %p397 = pneg %p76
        %p398 = pneg %p73
        %s399 = sand.u32 %s29, 1
        %s400 = scalar_lea.sflag [#allocation6], %s399
        %s401 = sand.u32 %s89, 1
        %s402 = smul.addr %s401, 8
        %s403 = scalar_lea.vmem [#allocation7], %s402
        %p404 = pneg %p102
        %p405 = pneg %p99
        %p406 = pneg %p123
        %p407 = pneg %p120
        %p408 = pneg %p144
        %p409 = pneg %p141
        %p410 = pneg %p165
        %p411 = pneg %p162
        %p412 = pneg %p186
        %p413 = pneg %p183
        %p414 = pneg %p207
        %p415 = pneg %p204
        %p416 = pneg %p228
        %p417 = pneg %p225
        %p418 = pneg %p254
        %p419 = pneg %p251
        %s420 = sand.u32 %s241, 1
        %s421 = scalar_lea.sflag [#allocation4], %s420
        %s422 = sand.u32 %s241, 1
        %s423 = smul.addr %s422, 8
        %s424 = scalar_lea.vmem [#allocation8], %s423
        %v425 = vld [vmem:[%s359] sm:$0xff]
        %v426 = vld [vmem:[%s369] sm:$0xff]
        %v427 = vld [vmem:[%s379] sm:$0xff]
        %v428 = vld [vmem:[%s3] sm:$0xff]
        %v429 = vld [vmem:[%s3 + $0x8] sm:$0xff]
        %v430 = vld [vmem:[%s3 + $0x10] sm:$0xff]
        %v431 = vld [vmem:[%s3 + $0x18] sm:$0xff]
        %vm432 = vcmask 261120
        %v434 = vsel %vm432, %v425, 0
        %436 = vmatpush.msra.mxu0 0.0
        %437 = vmatpush.msra.mxu0 0.0
        %438 = vmatpush.msra.mxu0 0.0
        %439 = vmatpush.msra.mxu0 0.0
        %440 = vmatpush.msra.mxu0 0.0
        %441 = vmatpush.msra.mxu0 0.0
        %442 = vmatpush.msra.mxu0 0.0
        %443 = vmatpush.msra.mxu0 0.0
        %444 = vmatpush.msra.mxu0 0.0
        %445 = vmatpush.msra.mxu0 0.0
        %446 = vmatpush.msra.mxu0 0.0
        %447 = vmatpush.msra.mxu0 0.0
        %448 = vmatpush.msra.mxu0 %v431
        %449 = vmatpush.msra.mxu0 %v430
        %450 = vmatpush.msra.mxu0 %v429
        %451 = vmatpush.msra.mxu0 %v428
        %452 = vmatmul.f32.gmra.mxu0 %v434
        %v453 = vpop.f32.mrf.mxu0
        %v454 = vadd.f32 0.0, %v453
        %455 = vdwg.mxu0
        %v456 = vld [vmem:[%s4] sm:$0xff]
        %v457 = vld [vmem:[%s4 + $0x8] sm:$0xff]
        %v458 = vld [vmem:[%s4 + $0x10] sm:$0xff]
        %v459 = vld [vmem:[%s4 + $0x18] sm:$0xff]
        %v461 = vsel %vm432, %v426, 0
        %463 = vmatpush.msra.mxu0 0.0
        %464 = vmatpush.msra.mxu0 0.0
        %465 = vmatpush.msra.mxu0 0.0
        %466 = vmatpush.msra.mxu0 0.0
        %467 = vmatpush.msra.mxu0 0.0
        %468 = vmatpush.msra.mxu0 0.0
        %469 = vmatpush.msra.mxu0 0.0
        %470 = vmatpush.msra.mxu0 0.0
        %471 = vmatpush.msra.mxu0 0.0
        %472 = vmatpush.msra.mxu0 0.0
        %473 = vmatpush.msra.mxu0 0.0
        %474 = vmatpush.msra.mxu0 0.0
        %475 = vmatpush.msra.mxu0 %v459
        %476 = vmatpush.msra.mxu0 %v458
        %477 = vmatpush.msra.mxu0 %v457
        %478 = vmatpush.msra.mxu0 %v456
        %479 = vmatmul.f32.gmra.mxu0 %v461
        %v480 = vpop.f32.mrf.mxu0
        %v481 = vadd.f32 0.0, %v480
        %482 = vdwg.mxu0
        %v483 = vld [vmem:[%s5] sm:$0xff]
        %v484 = vld [vmem:[%s5 + $0x8] sm:$0xff]
        %v485 = vld [vmem:[%s5 + $0x10] sm:$0xff]
        %v486 = vld [vmem:[%s5 + $0x18] sm:$0xff]
        %v488 = vsel %vm432, %v427, 0
        %490 = vmatpush.msra.mxu0 0.0
        %491 = vmatpush.msra.mxu0 0.0
        %492 = vmatpush.msra.mxu0 0.0
        %493 = vmatpush.msra.mxu0 0.0
        %494 = vmatpush.msra.mxu0 0.0
        %495 = vmatpush.msra.mxu0 0.0
        %496 = vmatpush.msra.mxu0 0.0
        %497 = vmatpush.msra.mxu0 0.0
        %498 = vmatpush.msra.mxu0 0.0
        %499 = vmatpush.msra.mxu0 0.0
        %500 = vmatpush.msra.mxu0 0.0
        %501 = vmatpush.msra.mxu0 0.0
        %502 = vmatpush.msra.mxu0 %v486
        %503 = vmatpush.msra.mxu0 %v485
        %504 = vmatpush.msra.mxu0 %v484
        %505 = vmatpush.msra.mxu0 %v483
        %506 = vmatmul.f32.gmra.mxu0 %v488
        %v507 = vpop.f32.mrf.mxu0
        %v508 = vadd.f32 0.0, %v507
        %509 = vdwg.mxu0
        %v510 = vld [vmem:[%s6] sm:$0xff]
        %v511 = vld [vmem:[%s6 + $0x8] sm:$0xff]
        %v512 = vld [vmem:[%s6 + $0x10] sm:$0xff]
        %v513 = vld [vmem:[%s6 + $0x18] sm:$0xff]
        %v514 = vld [vmem:[%s6 + $0x20] sm:$0xff]
        %v515 = vld [vmem:[%s6 + $0x28] sm:$0xff]
        %v516 = vld [vmem:[%s6 + $0x30] sm:$0xff]
        %v517 = vld [vmem:[%s6 + $0x38] sm:$0xff]
        %518 = vmatpush.msra.mxu0 0.0
        %519 = vmatpush.msra.mxu0 0.0
        %520 = vmatpush.msra.mxu0 0.0
        %521 = vmatpush.msra.mxu0 0.0
        %522 = vmatpush.msra.mxu0 0.0
        %523 = vmatpush.msra.mxu0 0.0
        %524 = vmatpush.msra.mxu0 0.0
        %525 = vmatpush.msra.mxu0 0.0
        %526 = vmatpush.msra.mxu0 0.0
        %527 = vmatpush.msra.mxu0 0.0
        %528 = vmatpush.msra.mxu0 0.0
        %529 = vmatpush.msra.mxu0 0.0
        %530 = vmatpush.msra.mxu0 %v517
        %531 = vmatpush.msra.mxu0 %v516
        %532 = vmatpush.msra.mxu0 %v515
        %533 = vmatpush.msra.mxu0 %v514
        %534 = vmatmul.f32.gmra.mxu0 %v461
        %v535 = vpop.f32.mrf.mxu0
        %v536 = vadd.f32 0.0, %v535
        %537 = vdwg.mxu0
        %538 = vmatpush.msra.mxu0 0.0
        %539 = vmatpush.msra.mxu0 0.0
        %540 = vmatpush.msra.mxu0 0.0
        %541 = vmatpush.msra.mxu0 0.0
        %542 = vmatpush.msra.mxu0 0.0
        %543 = vmatpush.msra.mxu0 0.0
        %544 = vmatpush.msra.mxu0 0.0
        %545 = vmatpush.msra.mxu0 0.0
        %546 = vmatpush.msra.mxu0 0.0
        %547 = vmatpush.msra.mxu0 0.0
        %548 = vmatpush.msra.mxu0 0.0
        %549 = vmatpush.msra.mxu0 0.0
        %550 = vmatpush.msra.mxu0 %v513
        %551 = vmatpush.msra.mxu0 %v512
        %552 = vmatpush.msra.mxu0 %v511
        %553 = vmatpush.msra.mxu0 %v510
        %554 = vmatmul.f32.gmra.mxu0 %v434
        %v555 = vpop.f32.mrf.mxu0
        %v556 = vadd.f32 %v536, %v555
        %557 = vdwg.mxu0
        %v558 = vld [vmem:[%s6 + $0x40] sm:$0xff]
        %v559 = vld [vmem:[%s6 + $0x48] sm:$0xff]
        %v560 = vld [vmem:[%s6 + $0x50] sm:$0xff]
        %v561 = vld [vmem:[%s6 + $0x58] sm:$0xff]
        %562 = vmatpush.msra.mxu0 0.0
        %563 = vmatpush.msra.mxu0 0.0
        %564 = vmatpush.msra.mxu0 0.0
        %565 = vmatpush.msra.mxu0 0.0
        %566 = vmatpush.msra.mxu0 0.0
        %567 = vmatpush.msra.mxu0 0.0
        %568 = vmatpush.msra.mxu0 0.0
        %569 = vmatpush.msra.mxu0 0.0
        %570 = vmatpush.msra.mxu0 0.0
        %571 = vmatpush.msra.mxu0 0.0
        %572 = vmatpush.msra.mxu0 0.0
        %573 = vmatpush.msra.mxu0 0.0
        %574 = vmatpush.msra.mxu0 %v561
        %575 = vmatpush.msra.mxu0 %v560
        %576 = vmatpush.msra.mxu0 %v559
        %577 = vmatpush.msra.mxu0 %v558
        %578 = vmatmul.f32.gmra.mxu0 %v488
        %v579 = vpop.f32.mrf.mxu0
        %v580 = vadd.f32 0.0, %v579
        %581 = vdwg.mxu0
        %v582 = vadd.f32 %v556, %v580
        %v583 = vld [vmem:[%s7] sm:$0x1]
        %v585 = vperm.slane %v583, 0
        %v587 = vadd.f32 %v582, %v585
        %v588 = vmin.f32 %v587, 0.0
        %v589 = vand.u32 2147483647, %v587
        %v590 = vsub.f32 0.0, %v589
        %v591 = vmul.f32 %v590, 1.442695
        %v592 = vpow.pop %v591
        %v593 = vadd.f32 %v592, 1.0
        %v594 = vlog2.pop %v593
        %v595 = vmul.f32 %v594, 0.6931472
        %v596 = vsub.f32 %v588, %v595
        %v597 = vlaneseq
        %v598 = vshrl.u32 %v597, 7
        %v599 = vlaneseq
        %v600 = vand.u32 %v599, 127
        %vm601 = vcmp.ge.s32.totalorder %v598, %v600
        %v602 = vsel %vm601, 1, 0
        %v603 = vcvt.s32.f32 %v602
        %605 = vrot.lane.b32.xlu0 %v596, 124
        %v606 = vpop.permute.xlu0 %605
        %vm608 = vcmask 64512
        %v610 = vsel %vm608, %v603, 0
        %612 = vmatpush.msra.mxu0 0.0
        %613 = vmatpush.msra.mxu0 0.0
        %614 = vmatpush.msra.mxu0 0.0
        %615 = vmatpush.msra.mxu0 0.0
        %616 = vmatpush.msra.mxu0 0.0
        %617 = vmatpush.msra.mxu0 0.0
        %618 = vmatpush.msra.mxu0 0.0
        %619 = vmatpush.msra.mxu0 0.0
        %620 = vmatpush.msra.mxu0 0.0
        %621 = vmatpush.msra.mxu0 0.0
        %622 = vmatpush.msra.mxu0 0.0
        %623 = vmatpush.msra.mxu0 0.0
        %624 = vmatpush.msra.mxu0 0.0
        %625 = vmatpush.msra.mxu0 0.0
        %626 = vmatpush.msra.mxu0 0.0
        %627 = vmatpush.msra.mxu0 %v606
        %628 = vmatmul.f32.gmra.mxu0 %v610
        %v629 = vpop.f32.mrf.mxu0
        %v630 = vadd.f32 0.0, %v629
        %631 = vdwg.mxu0
        %632 = vxpose.xlu0.b32.start [1/16] %v630, 128
        %633 = vxpose.xlu0.b32.cont [2/16] 0.0, 128
        %634 = vxpose.xlu0.b32.cont [3/16] 0.0, 128
        %635 = vxpose.xlu0.b32.cont [4/16] 0.0, 128
        %636 = vxpose.xlu0.b32.cont [5/16] 0.0, 128
        %637 = vxpose.xlu0.b32.cont [6/16] 0.0, 128
        %638 = vxpose.xlu0.b32.cont [7/16] 0.0, 128
        %639 = vxpose.xlu0.b32.cont [8/16] 0.0, 128
        %640 = vxpose.xlu0.b32.cont [9/16] 0.0, 128
        %641 = vxpose.xlu0.b32.cont [10/16] 0.0, 128
        %642 = vxpose.xlu0.b32.cont [11/16] 0.0, 128
        %643 = vxpose.xlu0.b32.cont [12/16] 0.0, 128
        %644 = vxpose.xlu0.b32.cont [13/16] 0.0, 128
        %645 = vxpose.xlu0.b32.cont [14/16] 0.0, 128
        %646 = vxpose.xlu0.b32.cont [15/16] 0.0, 128
        %647 = vxpose.xlu0.b32.end [16/16] 0.0, 128
        %v648 = vpop.trf.xlu0
        %v649 = vpop.trf.xlu0
        %v650 = vpop.trf.xlu0
        %v651 = vpop.trf.xlu0
        %v652 = vpop.trf.xlu0
        %v653 = vpop.trf.xlu0
        %v654 = vpop.trf.xlu0
        %v655 = vpop.trf.xlu0
        %v656 = vpop.trf.xlu0
        %v657 = vpop.trf.xlu0
        %v658 = vpop.trf.xlu0
        %v659 = vpop.trf.xlu0
        %v660 = vpop.trf.xlu0
        %v661 = vpop.trf.xlu0
        %v662 = vpop.trf.xlu0
        %v663 = vpop.trf.xlu0
        %664 = vxpose.xlu0.b32.start [1/16] %v587, 128
        %665 = vxpose.xlu0.b32.cont [2/16] 0.0, 128
        %666 = vxpose.xlu0.b32.cont [3/16] 0.0, 128
        %667 = vxpose.xlu0.b32.cont [4/16] 0.0, 128
        %668 = vxpose.xlu0.b32.cont [5/16] 0.0, 128
        %669 = vxpose.xlu0.b32.cont [6/16] 0.0, 128
        %670 = vxpose.xlu0.b32.cont [7/16] 0.0, 128
        %671 = vxpose.xlu0.b32.cont [8/16] 0.0, 128
        %672 = vxpose.xlu0.b32.cont [9/16] 0.0, 128
        %673 = vxpose.xlu0.b32.cont [10/16] 0.0, 128
        %674 = vxpose.xlu0.b32.cont [11/16] 0.0, 128
        %675 = vxpose.xlu0.b32.cont [12/16] 0.0, 128
        %676 = vxpose.xlu0.b32.cont [13/16] 0.0, 128
        %677 = vxpose.xlu0.b32.cont [14/16] 0.0, 128
        %678 = vxpose.xlu0.b32.cont [15/16] 0.0, 128
        %679 = vxpose.xlu0.b32.end [16/16] 0.0, 128
        %v680 = vpop.trf.xlu0
        %v681 = vpop.trf.xlu0
        %v682 = vpop.trf.xlu0
        %v683 = vpop.trf.xlu0
        %v684 = vpop.trf.xlu0
        %v685 = vpop.trf.xlu0
        %v686 = vpop.trf.xlu0
        %v687 = vpop.trf.xlu0
        %v688 = vpop.trf.xlu0
        %v689 = vpop.trf.xlu0
        %v690 = vpop.trf.xlu0
        %v691 = vpop.trf.xlu0
        %v692 = vpop.trf.xlu0
        %v693 = vpop.trf.xlu0
        %v694 = vpop.trf.xlu0
        %v695 = vpop.trf.xlu0
        %697 = vset.pattern.permute.xlu0 0
        %698 = vperm.xlu0 %697, %v630
        %v699 = vpop.permute.xlu0 %698
        %v701 = vperm.slane %v648, 0
        %v702 = vsub.f32 %v699, %v701
        %v703 = vperm.slane %v680, 0
        %v704 = vadd.f32 %v702, %v703
        %v705 = vsel %vm601, %v704, -inf
        %v706 = vsel %vm608, %v705, -inf
        %707 = vmax.xlane.f32.xlu0 %v706
        %v708 = vpop.xlane.xlu0 %707
        %v710 = vsel %vm608, %v454, 0
        %v713 = vsel %vm608, %v481, 0
        %715 = vmatpush.xpose.msra.mxu0 0.0
        %716 = vmatpush.xpose.msra.mxu0 0.0
        %717 = vmatpush.xpose.msra.mxu0 0.0
        %718 = vmatpush.xpose.msra.mxu0 0.0
        %719 = vmatpush.xpose.msra.mxu0 0.0
        %720 = vmatpush.xpose.msra.mxu0 0.0
        %721 = vmatpush.xpose.msra.mxu0 0.0
        %722 = vmatpush.xpose.msra.mxu0 0.0
        %723 = vmatpush.xpose.msra.mxu0 0.0
        %724 = vmatpush.xpose.msra.mxu0 0.0
        %725 = vmatpush.xpose.msra.mxu0 0.0
        %726 = vmatpush.xpose.msra.mxu0 0.0
        %727 = vmatpush.xpose.msra.mxu0 0.0
        %728 = vmatpush.xpose.msra.mxu0 0.0
        %729 = vmatpush.xpose.msra.mxu0 0.0
        %730 = vmatpush.xpose.msra.mxu0 %v713
        %731 = vmatmul.f32.gmra.mxu0 %v710
        %v732 = vpop.f32.mrf.mxu0
        %v733 = vadd.f32 0.0, %v732
        %734 = vdwg.mxu0
        %v735 = vmul.f32 %v733, 0.35355338
        %v736 = vsub.f32 %v705, %v708
        %v737 = vmul.f32 %v736, 1.442695
        %v738 = vpow.pop %v737
        %v739 = vmul.f32 %v735, %v738
        %v740 = vsel %vm608, %v739, 0.0
        %741 = vadd.xlane.f32.xlu0 %v740
        %v742 = vpop.xlane.xlu0 %741
        %v743 = vand.u32 2147483647, %v742
        %v744 = vsub.f32 0.0, %v708
        %v745 = vmul.f32 %v744, 1.442695
        %v746 = vpow.pop %v745
        %v747 = vmax.f32 %v743, %v746
        %v748 = vadd.f32 %v747, 1e-08
        %v749 = vrcp.pop %v748
        %v750 = vmul.f32 %v739, %v749
        %v752 = vsel %vm608, %v750, 0
        %754 = vmatpush.msra.mxu0 0.0
        %755 = vmatpush.msra.mxu0 0.0
        %756 = vmatpush.msra.mxu0 0.0
        %757 = vmatpush.msra.mxu0 0.0
        %758 = vmatpush.msra.mxu0 0.0
        %759 = vmatpush.msra.mxu0 0.0
        %760 = vmatpush.msra.mxu0 0.0
        %761 = vmatpush.msra.mxu0 0.0
        %762 = vmatpush.msra.mxu0 0.0
        %763 = vmatpush.msra.mxu0 0.0
        %764 = vmatpush.msra.mxu0 0.0
        %765 = vmatpush.msra.mxu0 0.0
        %766 = vmatpush.msra.mxu0 0.0
        %767 = vmatpush.msra.mxu0 0.0
        %768 = vmatpush.msra.mxu0 0.0
        %769 = vmatpush.msra.mxu0 %v508
        %770 = vmatmul.f32.gmra.mxu0 %v752
        %v771 = vpop.f32.mrf.mxu0
        %v772 = vadd.f32 0.0, %v771
        %773 = vdwg.mxu0
        %v774 = vsel %vm608, %v772, 0.0
        %775 = vadd.xlane.f32.xlu0 %v774
        %v776 = vpop.xlane.xlu0 %775
        %v777 = vrcp.pop 8.0
        %v778 = vmul.f32 8.0, %v777
        %v779 = vsub.f32 1.0, %v778
        %v780 = vmul.f32 %v777, %v779
        %v781 = vadd.f32 %v777, %v780
        %vm782 = vweird.f32 %v777
        %v783 = vsel %vm782, %v777, %v781
        %v784 = vmul.f32 %v776, %v783
        %v785 = vsub.f32 %v772, %v784
        %v786 = vmul.f32 %v785, %v785
        %v787 = vsel %vm608, %v786, 0.0
        %788 = vadd.xlane.f32.xlu0 %v787
        %v789 = vpop.xlane.xlu0 %788
        %v790 = vmul.f32 %v789, %v783
        %v791 = vadd.f32 %v790, 1e-05
        %v792 = vrsqrt.pop %v791
        %v793 = vmul.f32 %v792, %v791
        %v794 = vmul.f32 %v793, %v792
        %v795 = vmul.f32 0.5, %v794
        %v796 = vsub.f32 1.5, %v795
        %v797 = vmul.f32 %v792, %v796
        %vm798 = vweird.f32 %v791
        %vm799 = vweird.f32 %v792
        %vm800 = vmor %vm798, %vm799
        %v801 = vsel %vm800, %v792, %v797
        %v802 = vmul.f32 %v785, %v801
        %v803 = vld [vmem:[%s8] sm:$0x1]
        %v805 = vperm.slane %v803, 0
        %v807 = vmul.f32 %v802, %v805
        %808 = vst.msk [vmem:[%s424] sm:$0xff] %vm608, %v807
        %809 = vset.pattern.permute.xlu0 1
        %810 = vperm.xlu0 %809, %v630
        %v811 = vpop.permute.xlu0 %810
        %v813 = vperm.slane %v648, 1
        %v814 = vsub.f32 %v811, %v813
        %v815 = vperm.slane %v680, 1
        %v816 = vadd.f32 %v814, %v815
        %v817 = vsel %vm601, %v816, -inf
        %v818 = vsel %vm608, %v817, -inf
        %819 = vmax.xlane.f32.xlu0 %v818
        %v820 = vpop.xlane.xlu0 %819
        %821 = vrot.lane.b32.xlu0 %v454, 120
        %v822 = vpop.permute.xlu0 %821
        %823 = vrot.lane.b32.xlu0 %v481, 120
        %v824 = vpop.permute.xlu0 %823
        %v825 = vsel %vm608, %v822, 0
        %v827 = vsel %vm608, %v824, 0
        %829 = vmatpush.xpose.msra.mxu0 0.0
        %830 = vmatpush.xpose.msra.mxu0 0.0
        %831 = vmatpush.xpose.msra.mxu0 0.0
        %832 = vmatpush.xpose.msra.mxu0 0.0
        %833 = vmatpush.xpose.msra.mxu0 0.0
        %834 = vmatpush.xpose.msra.mxu0 0.0
        %835 = vmatpush.xpose.msra.mxu0 0.0
        %836 = vmatpush.xpose.msra.mxu0 0.0
        %837 = vmatpush.xpose.msra.mxu0 0.0
        %838 = vmatpush.xpose.msra.mxu0 0.0
        %839 = vmatpush.xpose.msra.mxu0 0.0
        %840 = vmatpush.xpose.msra.mxu0 0.0
        %841 = vmatpush.xpose.msra.mxu0 0.0
        %842 = vmatpush.xpose.msra.mxu0 0.0
        %843 = vmatpush.xpose.msra.mxu0 0.0
        %844 = vmatpush.xpose.msra.mxu0 %v827
        %845 = vmatmul.f32.gmra.mxu0 %v825
        %v846 = vpop.f32.mrf.mxu0
        %v847 = vadd.f32 0.0, %v846
        %848 = vdwg.mxu0
        %v849 = vmul.f32 %v847, 0.35355338
        %v850 = vsub.f32 %v817, %v820
        %v851 = vmul.f32 %v850, 1.442695
        %v852 = vpow.pop %v851
        %v853 = vmul.f32 %v849, %v852
        %v854 = vsel %vm608, %v853, 0.0
        %855 = vadd.xlane.f32.xlu0 %v854
        %v856 = vpop.xlane.xlu0 %855
        %v857 = vand.u32 2147483647, %v856
        %v858 = vsub.f32 0.0, %v820
        %v859 = vmul.f32 %v858, 1.442695
        %v860 = vpow.pop %v859
        %v861 = vmax.f32 %v857, %v860
        %v862 = vadd.f32 %v861, 1e-08
        %v863 = vrcp.pop %v862
        %v864 = vmul.f32 %v853, %v863
        %866 = vrot.lane.b32.xlu0 %v508, 120
        %v867 = vpop.permute.xlu0 %866
        %v870 = vsel %vm608, %v864, 0
        %872 = vmatpush.msra.mxu0 0.0
        %873 = vmatpush.msra.mxu0 0.0
        %874 = vmatpush.msra.mxu0 0.0
        %875 = vmatpush.msra.mxu0 0.0
        %876 = vmatpush.msra.mxu0 0.0
        %877 = vmatpush.msra.mxu0 0.0
        %878 = vmatpush.msra.mxu0 0.0
        %879 = vmatpush.msra.mxu0 0.0
        %880 = vmatpush.msra.mxu0 0.0
        %881 = vmatpush.msra.mxu0 0.0
        %882 = vmatpush.msra.mxu0 0.0
        %883 = vmatpush.msra.mxu0 0.0
        %884 = vmatpush.msra.mxu0 0.0
        %885 = vmatpush.msra.mxu0 0.0
        %886 = vmatpush.msra.mxu0 0.0
        %887 = vmatpush.msra.mxu0 %v867
        %888 = vmatmul.f32.gmra.mxu0 %v870
        %v889 = vpop.f32.mrf.mxu0
        %v890 = vadd.f32 0.0, %v889
        %891 = vdwg.mxu0
        %v892 = vsel %vm608, %v890, 0.0
        %893 = vadd.xlane.f32.xlu0 %v892
        %v894 = vpop.xlane.xlu0 %893
        %v895 = vmul.f32 %v894, %v783
        %v896 = vsub.f32 %v890, %v895
        %v897 = vmul.f32 %v896, %v896
        %v898 = vsel %vm608, %v897, 0.0
        %899 = vadd.xlane.f32.xlu0 %v898
        %v900 = vpop.xlane.xlu0 %899
        %v901 = vmul.f32 %v900, %v783
        %v902 = vadd.f32 %v901, 1e-05
        %v903 = vrsqrt.pop %v902
        %v904 = vmul.f32 %v903, %v902
        %v905 = vmul.f32 %v904, %v903
        %v906 = vmul.f32 0.5, %v905
        %v907 = vsub.f32 1.5, %v906
        %v908 = vmul.f32 %v903, %v907
        %vm909 = vweird.f32 %v902
        %vm910 = vweird.f32 %v903
        %vm911 = vmor %vm909, %vm910
        %v912 = vsel %vm911, %v903, %v908
        %v913 = vmul.f32 %v896, %v912
        %v914 = vld [vmem:[%s8] sm:$0x1]
        %v916 = vperm.slane %v914, 0
        %917 = vrot.lane.b32.xlu0 %v916, 120
        %v918 = vpop.permute.xlu0 %917
        %v920 = vmul.f32 %v913, %v918
        %922 = vrot.lane.b32.xlu0 %v920, 8
        %v923 = vpop.permute.xlu0 %922
        %vm925 = vcmask 130112
        %926 = vst.msk [vmem:[%s424] sm:$0xff] %vm925, %v923
        %927 = vset.pattern.permute.xlu0 2
        %928 = vperm.xlu0 %927, %v630
        %v929 = vpop.permute.xlu0 %928
        %v931 = vperm.slane %v648, 2
        %v932 = vsub.f32 %v929, %v931
        %v933 = vperm.slane %v680, 2
        %v934 = vadd.f32 %v932, %v933
        %v935 = vsel %vm601, %v934, -inf
        %v936 = vsel %vm608, %v935, -inf
        %937 = vmax.xlane.f32.xlu0 %v936
        %v938 = vpop.xlane.xlu0 %937
        %939 = vrot.lane.b32.xlu0 %v454, 112
        %v940 = vpop.permute.xlu0 %939
        %941 = vrot.lane.b32.xlu0 %v481, 112
        %v942 = vpop.permute.xlu0 %941
        %v943 = vsel %vm608, %v940, 0
        %v945 = vsel %vm608, %v942, 0
        %947 = vmatpush.xpose.msra.mxu0 0.0
        %948 = vmatpush.xpose.msra.mxu0 0.0
        %949 = vmatpush.xpose.msra.mxu0 0.0
        %950 = vmatpush.xpose.msra.mxu0 0.0
        %951 = vmatpush.xpose.msra.mxu0 0.0
        %952 = vmatpush.xpose.msra.mxu0 0.0
        %953 = vmatpush.xpose.msra.mxu0 0.0
        %954 = vmatpush.xpose.msra.mxu0 0.0
        %955 = vmatpush.xpose.msra.mxu0 0.0
        %956 = vmatpush.xpose.msra.mxu0 0.0
        %957 = vmatpush.xpose.msra.mxu0 0.0
        %958 = vmatpush.xpose.msra.mxu0 0.0
        %959 = vmatpush.xpose.msra.mxu0 0.0
        %960 = vmatpush.xpose.msra.mxu0 0.0
        %961 = vmatpush.xpose.msra.mxu0 0.0
        %962 = vmatpush.xpose.msra.mxu0 %v945
        %963 = vmatmul.f32.gmra.mxu0 %v943
        %v964 = vpop.f32.mrf.mxu0
        %v965 = vadd.f32 0.0, %v964
        %966 = vdwg.mxu0
        %v967 = vmul.f32 %v965, 0.35355338
        %v968 = vsub.f32 %v935, %v938
        %v969 = vmul.f32 %v968, 1.442695
        %v970 = vpow.pop %v969
        %v971 = vmul.f32 %v967, %v970
        %v972 = vsel %vm608, %v971, 0.0
        %973 = vadd.xlane.f32.xlu0 %v972
        %v974 = vpop.xlane.xlu0 %973
        %v975 = vand.u32 2147483647, %v974
        %v976 = vsub.f32 0.0, %v938
        %v977 = vmul.f32 %v976, 1.442695
        %v978 = vpow.pop %v977
        %v979 = vmax.f32 %v975, %v978
        %v980 = vadd.f32 %v979, 1e-08
        %v981 = vrcp.pop %v980
        %v982 = vmul.f32 %v971, %v981
        %983 = vrot.lane.b32.xlu0 %v508, 112
        %v984 = vpop.permute.xlu0 %983
        %v987 = vsel %vm608, %v982, 0
        %989 = vmatpush.msra.mxu0 0.0
        %990 = vmatpush.msra.mxu0 0.0
        %991 = vmatpush.msra.mxu0 0.0
        %992 = vmatpush.msra.mxu0 0.0
        %993 = vmatpush.msra.mxu0 0.0
        %994 = vmatpush.msra.mxu0 0.0
        %995 = vmatpush.msra.mxu0 0.0
        %996 = vmatpush.msra.mxu0 0.0
        %997 = vmatpush.msra.mxu0 0.0
        %998 = vmatpush.msra.mxu0 0.0
        %999 = vmatpush.msra.mxu0 0.0
        %1000 = vmatpush.msra.mxu0 0.0
        %1001 = vmatpush.msra.mxu0 0.0
        %1002 = vmatpush.msra.mxu0 0.0
        %1003 = vmatpush.msra.mxu0 0.0
        %1004 = vmatpush.msra.mxu0 %v984
        %1005 = vmatmul.f32.gmra.mxu0 %v987
        %v1006 = vpop.f32.mrf.mxu0
        %v1007 = vadd.f32 0.0, %v1006
        %1008 = vdwg.mxu0
        %v1009 = vsel %vm608, %v1007, 0.0
        %1010 = vadd.xlane.f32.xlu0 %v1009
        %v1011 = vpop.xlane.xlu0 %1010
        %v1012 = vmul.f32 %v1011, %v783
        %v1013 = vsub.f32 %v1007, %v1012
        %v1014 = vmul.f32 %v1013, %v1013
        %v1015 = vsel %vm608, %v1014, 0.0
        %1016 = vadd.xlane.f32.xlu0 %v1015
        %v1017 = vpop.xlane.xlu0 %1016
        %v1018 = vmul.f32 %v1017, %v783
        %v1019 = vadd.f32 %v1018, 1e-05
        %v1020 = vrsqrt.pop %v1019
        %v1021 = vmul.f32 %v1020, %v1019
        %v1022 = vmul.f32 %v1021, %v1020
        %v1023 = vmul.f32 0.5, %v1022
        %v1024 = vsub.f32 1.5, %v1023
        %v1025 = vmul.f32 %v1020, %v1024
        %vm1026 = vweird.f32 %v1019
        %vm1027 = vweird.f32 %v1020
        %vm1028 = vmor %vm1026, %vm1027
        %v1029 = vsel %vm1028, %v1020, %v1025
        %v1030 = vmul.f32 %v1013, %v1029
        %v1031 = vld [vmem:[%s8] sm:$0x1]
        %v1033 = vperm.slane %v1031, 0
        %1034 = vrot.lane.b32.xlu0 %v1033, 112
        %v1035 = vpop.permute.xlu0 %1034
        %v1037 = vmul.f32 %v1030, %v1035
        %1039 = vrot.lane.b32.xlu0 %v1037, 16
        %v1040 = vpop.permute.xlu0 %1039
        %vm1042 = vcmask 195712
        %1043 = vst.msk [vmem:[%s424] sm:$0xff] %vm1042, %v1040
        %1044 = vset.pattern.permute.xlu0 3
        %1045 = vperm.xlu0 %1044, %v630
        %v1046 = vpop.permute.xlu0 %1045
        %v1048 = vperm.slane %v648, 3
        %v1049 = vsub.f32 %v1046, %v1048
        %v1050 = vperm.slane %v680, 3
        %v1051 = vadd.f32 %v1049, %v1050
        %v1052 = vsel %vm601, %v1051, -inf
        %v1053 = vsel %vm608, %v1052, -inf
        %1054 = vmax.xlane.f32.xlu0 %v1053
        %v1055 = vpop.xlane.xlu0 %1054
        %1056 = vrot.lane.b32.xlu0 %v454, 104
        %v1057 = vpop.permute.xlu0 %1056
        %1058 = vrot.lane.b32.xlu0 %v481, 104
        %v1059 = vpop.permute.xlu0 %1058
        %v1060 = vsel %vm608, %v1057, 0
        %v1062 = vsel %vm608, %v1059, 0
        %1064 = vmatpush.xpose.msra.mxu0 0.0
        %1065 = vmatpush.xpose.msra.mxu0 0.0
        %1066 = vmatpush.xpose.msra.mxu0 0.0
        %1067 = vmatpush.xpose.msra.mxu0 0.0
        %1068 = vmatpush.xpose.msra.mxu0 0.0
        %1069 = vmatpush.xpose.msra.mxu0 0.0
        %1070 = vmatpush.xpose.msra.mxu0 0.0
        %1071 = vmatpush.xpose.msra.mxu0 0.0
        %1072 = vmatpush.xpose.msra.mxu0 0.0
        %1073 = vmatpush.xpose.msra.mxu0 0.0
        %1074 = vmatpush.xpose.msra.mxu0 0.0
        %1075 = vmatpush.xpose.msra.mxu0 0.0
        %1076 = vmatpush.xpose.msra.mxu0 0.0
        %1077 = vmatpush.xpose.msra.mxu0 0.0
        %1078 = vmatpush.xpose.msra.mxu0 0.0
        %1079 = vmatpush.xpose.msra.mxu0 %v1062
        %1080 = vmatmul.f32.gmra.mxu0 %v1060
        %v1081 = vpop.f32.mrf.mxu0
        %v1082 = vadd.f32 0.0, %v1081
        %1083 = vdwg.mxu0
        %v1084 = vmul.f32 %v1082, 0.35355338
        %v1085 = vsub.f32 %v1052, %v1055
        %v1086 = vmul.f32 %v1085, 1.442695
        %v1087 = vpow.pop %v1086
        %v1088 = vmul.f32 %v1084, %v1087
        %v1089 = vsel %vm608, %v1088, 0.0
        %1090 = vadd.xlane.f32.xlu0 %v1089
        %v1091 = vpop.xlane.xlu0 %1090
        %v1092 = vand.u32 2147483647, %v1091
        %v1093 = vsub.f32 0.0, %v1055
        %v1094 = vmul.f32 %v1093, 1.442695
        %v1095 = vpow.pop %v1094
        %v1096 = vmax.f32 %v1092, %v1095
        %v1097 = vadd.f32 %v1096, 1e-08
        %v1098 = vrcp.pop %v1097
        %v1099 = vmul.f32 %v1088, %v1098
        %1100 = vrot.lane.b32.xlu0 %v508, 104
        %v1101 = vpop.permute.xlu0 %1100
        %v1104 = vsel %vm608, %v1099, 0
        %1106 = vmatpush.msra.mxu0 0.0
        %1107 = vmatpush.msra.mxu0 0.0
        %1108 = vmatpush.msra.mxu0 0.0
        %1109 = vmatpush.msra.mxu0 0.0
        %1110 = vmatpush.msra.mxu0 0.0
        %1111 = vmatpush.msra.mxu0 0.0
        %1112 = vmatpush.msra.mxu0 0.0
        %1113 = vmatpush.msra.mxu0 0.0
        %1114 = vmatpush.msra.mxu0 0.0
        %1115 = vmatpush.msra.mxu0 0.0
        %1116 = vmatpush.msra.mxu0 0.0
        %1117 = vmatpush.msra.mxu0 0.0
        %1118 = vmatpush.msra.mxu0 0.0
        %1119 = vmatpush.msra.mxu0 0.0
        %1120 = vmatpush.msra.mxu0 0.0
        %1121 = vmatpush.msra.mxu0 %v1101
        %1122 = vmatmul.f32.gmra.mxu0 %v1104
        %v1123 = vpop.f32.mrf.mxu0
        %v1124 = vadd.f32 0.0, %v1123
        %1125 = vdwg.mxu0
        %v1126 = vsel %vm608, %v1124, 0.0
        %1127 = vadd.xlane.f32.xlu0 %v1126
        %v1128 = vpop.xlane.xlu0 %1127
        %v1129 = vmul.f32 %v1128, %v783
        %v1130 = vsub.f32 %v1124, %v1129
        %v1131 = vmul.f32 %v1130, %v1130
        %v1132 = vsel %vm608, %v1131, 0.0
        %1133 = vadd.xlane.f32.xlu0 %v1132
        %v1134 = vpop.xlane.xlu0 %1133
        %v1135 = vmul.f32 %v1134, %v783
        %v1136 = vadd.f32 %v1135, 1e-05
        %v1137 = vrsqrt.pop %v1136
        %v1138 = vmul.f32 %v1137, %v1136
        %v1139 = vmul.f32 %v1138, %v1137
        %v1140 = vmul.f32 0.5, %v1139
        %v1141 = vsub.f32 1.5, %v1140
        %v1142 = vmul.f32 %v1137, %v1141
        %vm1143 = vweird.f32 %v1136
        %vm1144 = vweird.f32 %v1137
        %vm1145 = vmor %vm1143, %vm1144
        %v1146 = vsel %vm1145, %v1137, %v1142
        %v1147 = vmul.f32 %v1130, %v1146
        %v1148 = vld [vmem:[%s8] sm:$0x1]
        %v1150 = vperm.slane %v1148, 0
        %1151 = vrot.lane.b32.xlu0 %v1150, 104
        %v1152 = vpop.permute.xlu0 %1151
        %v1154 = vmul.f32 %v1147, %v1152
        %1156 = vrot.lane.b32.xlu0 %v1154, 24
        %v1157 = vpop.permute.xlu0 %1156
        %vm1159 = vcmask 261312
        %1160 = vst.msk [vmem:[%s424] sm:$0xff] %vm1159, %v1157
        %s1161 = sand.u32 %s241, 1
        %s1162 = scalar_lea.sflag [#allocation4], %s1161
        %s1163 = sand.u32 %s241, 1
        %s1164 = smul.addr %s1163, 8
        %s1165 = scalar_lea.vmem [#allocation8], %s1164
        // Predicated region
        $region69: #{tpu_custom_call.1} parent=55 // pred_check
          %p1166 = pneg %p251
        $region70: #{tpu_custom_call.1} parent=55 // pred_check_branch
          %1168 = sbr.rel (%p1166) target = $region72
        $region71: #{tpu_custom_call.1} parent=55 // pred_region
          %1170 = vsyncadd %s1162, 0
          %s1171 = smul.addr %s29, 8
          %s1172 = scalar_lea.hbm %s9, %s1171
          %s1174 = sshll.u32 %s1165, 4
          %s1175 = int_to_ptr.vmem [resolvable:$true] %s1174
          %s1176 = sshll.u32 %s1172, 4
          %s1177 = int_to_ptr.hbm [resolvable:$true] %s1176
          %1179 = dma.vmem_to_hbm [thread:$0]  %s1175, 128, %s1177, %s1162
        $region72: #{tpu_custom_call.1} parent=55 // pred_fallthru
          _
      $region56: #{tpu_custom_call.1} parent=5 // pred_fallthru
        _
      %p1180 = scmp.le.s32.totalorder 2, %s24
      // Predicated region
      $region73: #{tpu_custom_call.1} parent=5 // pred_check
        %p1181 = pneg %p1180
      $region74: #{tpu_custom_call.1} parent=5 // pred_check_branch
        %1183 = sbr.rel (%p1181) target = $region76
      $region75: #{tpu_custom_call.1} parent=5 // pred_region
        %s1184 = ssub.s32 %s24, 2
        // Predicated region
        $region77: #{tpu_custom_call.1} parent=75 // pred_check
          %p1185 = pneg %p257
        $region78: #{tpu_custom_call.1} parent=75 // pred_check_branch
          %1187 = sbr.rel (%p1185) target = $region80
        $region79: #{tpu_custom_call.1} parent=75 // pred_region
          %s1188 = sand.u32 %s242, 1
          %s1189 = scalar_lea.sflag [#allocation4], %s1188
          %s1190 = sand.u32 %s242, 1
          %s1191 = smul.addr %s1190, 8
          %s1192 = scalar_lea.vmem [#allocation8], %s1191
          %1194 = dma.done %s1189, 128
        $region80: #{tpu_custom_call.1} parent=75 // pred_fallthru
          _
      $region76: #{tpu_custom_call.1} parent=5 // pred_fallthru
        _
    $region6: #{tpu_custom_call.1} parent=1 // loop_footer
      %s28 = sadd.s32 1, %s24
    $region7: #{tpu_custom_call.1} parent=1 // loop_footer_branch
      %23 = sbr.rel target = $region3
    $region8: #{tpu_custom_call.1} parent=1 // loop_exit
      _
    %1195 = vsyncpa [#allocation3], 1
    %s1196 = scalar_lea.sflag [#allocation3], 1
    %1197 = vsyncpa %s1196, 1
    %1198 = vsyncpa [#allocation6], 1
    %s1199 = scalar_lea.sflag [#allocation6], 1
    %1200 = vsyncpa %s1199, 1
    %1201 = vsyncpa [#allocation4], 1
    %s1202 = scalar_lea.sflag [#allocation4], 1
    %1203 = vsyncpa %s1202, 1

</llo_original>
